<compile_context>
chip_gen: v5e
topology: v5e:2x2
jax: 0.10.0
libtpu: 0.0.40
codegen_flags: <defaults>
</compile_context>

<pallas_src>
import jax
import jax.numpy as jnp
from jax.experimental import pallas as pl
from jax.experimental.pallas import tpu as pltpu

EPS = 1e-3


def _fused_kernel(x_ref, s_ref, w1_ref, w2_ref, gamma_ref, beta_ref, out_ref):
    # x_ref:     (Cin,  P)   channels x pixels, lane-dense
    # s_ref:     (Cmid, P)   skip connection
    # w1_ref:    (Cmid, Cin) 1x1 conv weight (squeezed)
    # w2_ref:    (Cout, Cmid)
    # gamma_ref: (Cmid, 1)
    # beta_ref:  (Cmid, 1)
    # out_ref:   (Cout, P)
    x = x_ref[...]
    y = jnp.dot(w1_ref[...], x, preferred_element_type=jnp.float32)      # (Cmid, P)

    inv_p = 1.0 / y.shape[1]                                             # static
    mean = jnp.sum(y, axis=1, keepdims=True) * inv_p                     # (Cmid, 1)
    yc = y - mean
    var = jnp.sum(yc * yc, axis=1, keepdims=True) * inv_p                # centered, robust

    a = gamma_ref[...] * jax.lax.rsqrt(var + EPS)                        # (Cmid, 1)
    z = a * yc + beta_ref[...] + s_ref[...]                              # (Cmid, P)

    out_ref[...] = jnp.dot(w2_ref[...], z, preferred_element_type=jnp.float32)  # (Cout, P)


def fused_forward(x69_nchw, x57_nchw, w1_oi, gamma, beta, w2_oi):
    """x69_nchw: (N,120,H,W), x57_nchw: (N,40,H,W).
    w1_oi: (40,120) conv2d23 weight (1x1 squeezed), w2_oi: (240,40) conv2d24 weight.
    Returns (N,240,H,W) with training-mode BN semantics."""
    N, Cin, H, W = x69_nchw.shape
    Cmid = w1_oi.shape[0]
    Cout = w2_oi.shape[0]
    P = N * H * W

    # channels x pixels layout (free for N=1: NCHW is already (C, H*W)); no padding --
    # block_shape == full array dims is legal even when P isn't a multiple of 128.
    x_cp = jnp.transpose(x69_nchw, (1, 0, 2, 3)).reshape(Cin, P).astype(jnp.float32)
    s_cp = jnp.transpose(x57_nchw, (1, 0, 2, 3)).reshape(Cmid, P).astype(jnp.float32)

    w1 = w1_oi.astype(jnp.float32)                    # (Cmid, Cin)
    w2 = w2_oi.astype(jnp.float32)                    # (Cout, Cmid)
    g2 = gamma.astype(jnp.float32).reshape(Cmid, 1)
    b2 = beta.astype(jnp.float32).reshape(Cmid, 1)

    cost = pl.CostEstimate(
        flops=2 * P * Cmid * Cin + 2 * P * Cout * Cmid + 8 * P * Cmid,
        transcendentals=Cmid,
        bytes_accessed=4 * (P * (Cin + Cmid + Cout) + Cmid * Cin + Cout * Cmid + 2 * Cmid),
    )

    out_cp = pl.pallas_call(
        _fused_kernel,
        out_shape=jax.ShapeDtypeStruct((Cout, P), jnp.float32),
        grid=(1,),
        in_specs=[
            pl.BlockSpec((Cin, P), lambda i: (0, 0)),
            pl.BlockSpec((Cmid, P), lambda i: (0, 0)),
            pl.BlockSpec((Cmid, Cin), lambda i: (0, 0)),
            pl.BlockSpec((Cout, Cmid), lambda i: (0, 0)),
            pl.BlockSpec((Cmid, 1), lambda i: (0, 0)),
            pl.BlockSpec((Cmid, 1), lambda i: (0, 0)),
        ],
        out_specs=pl.BlockSpec((Cout, P), lambda i: (0, 0)),
        compiler_params=pltpu.CompilerParams(
            dimension_semantics=("arbitrary",),
            vmem_limit_bytes=32 * 1024 * 1024,
        ),
        cost_estimate=cost,
    )(x_cp, s_cp, w1, w2, g2, b2)

    out = out_cp.reshape(Cout, N, H, W)
    return jnp.transpose(out, (1, 0, 2, 3))


def reference_forward(x69_nchw, x57_nchw, w1_oi, gamma, beta, w2_oi):
    """Pure-JAX reference of the same semantics (training-mode BN)."""
    y = jnp.einsum("nchw,oc->nohw", x69_nchw, w1_oi)
    mean = jnp.mean(y, axis=(0, 2, 3), keepdims=True)
    var = jnp.mean((y - mean) ** 2, axis=(0, 2, 3), keepdims=True)
    y_hat = (y - mean) / jnp.sqrt(var + EPS)
    z = y_hat * gamma.reshape(1, -1, 1, 1) + beta.reshape(1, -1, 1, 1) + x57_nchw
    return jnp.einsum("nchw,oc->nohw", z, w2_oi)


if __name__ == "__main__":
    key = jax.random.PRNGKey(0)
    k1, k2, k3, k4, k5, k6 = jax.random.split(key, 6)

    N, H, W = 1, 28, 28
    Cin, Cmid, Cout = 120, 40, 240

    # module inputs
    x69 = jax.random.normal(k1, (N, Cin, H, W), dtype=jnp.float32)
    x57 = jax.random.normal(k2, (N, Cmid, H, W), dtype=jnp.float32)

    # deterministic synthetic parameters (shapes from the module __init__)
    w_conv23 = jax.random.normal(k3, (Cmid, Cin), dtype=jnp.float32) * 0.05   # (40,120,1,1) squeezed
    w_conv24 = jax.random.normal(k4, (Cout, Cmid), dtype=jnp.float32) * 0.05  # (240,40,1,1) squeezed
    gamma = 1.0 + 0.1 * jax.random.normal(k5, (Cmid,), dtype=jnp.float32)
    beta = 0.1 * jax.random.normal(k6, (Cmid,), dtype=jnp.float32)

    out = fused_forward(x69, x57, w_conv23, gamma, beta, w_conv24)
    out = jax.block_until_ready(out)

    ref = reference_forward(x69, x57, w_conv23, gamma, beta, w_conv24)
    assert out.shape == (N, Cout, H, W), out.shape
    assert jnp.allclose(out, ref, atol=1e-3, rtol=1e-3), float(jnp.max(jnp.abs(out - ref)))

    print("KERNEL_OK")
</pallas_src>

<mosaic_0001>
module attributes {stable_mosaic.version = 11 : i64} {
  func.func @_fused_kernel(%arg0: i32, %arg1: memref<120x784xf32, #tpu.memory_space<vmem>>, %arg2: memref<40x784xf32, #tpu.memory_space<vmem>>, %arg3: memref<40x120xf32, #tpu.memory_space<vmem>>, %arg4: memref<240x40xf32, #tpu.memory_space<vmem>>, %arg5: memref<40x1xf32, #tpu.memory_space<vmem>>, %arg6: memref<40x1xf32, #tpu.memory_space<vmem>>, %arg7: memref<240x784xf32, #tpu.memory_space<vmem>>) attributes {dimension_semantics = [#tpu.dimension_semantics<arbitrary>], iteration_bounds = array<i64: 1>, scalar_prefetch = 0 : i64, scratch_operands = 0 : i64, tpu.core_type = #tpu.core_type<tc>, window_params = [{pipeline_mode = #tpu.pipeline_mode<synchronous>, transform_indices = @transform_0, window_bounds = array<i64: 120, 784>}, {pipeline_mode = #tpu.pipeline_mode<synchronous>, transform_indices = @transform_1, window_bounds = array<i64: 40, 784>}, {pipeline_mode = #tpu.pipeline_mode<synchronous>, transform_indices = @transform_2, window_bounds = array<i64: 40, 120>}, {pipeline_mode = #tpu.pipeline_mode<synchronous>, transform_indices = @transform_3, window_bounds = array<i64: 240, 40>}, {pipeline_mode = #tpu.pipeline_mode<synchronous>, transform_indices = @transform_4, window_bounds = array<i64: 40, 1>}, {pipeline_mode = #tpu.pipeline_mode<synchronous>, transform_indices = @transform_5, window_bounds = array<i64: 40, 1>}, {pipeline_mode = #tpu.pipeline_mode<synchronous>, transform_indices = @transform_6, window_bounds = array<i64: 240, 784>}]} {
    %c0 = arith.constant 0 : index
    %c0_0 = arith.constant 0 : index
    %0 = vector.load %arg1[%c0, %c0_0] : memref<120x784xf32, #tpu.memory_space<vmem>>, vector<120x784xf32>
    %c0_1 = arith.constant 0 : index
    %c0_2 = arith.constant 0 : index
    %1 = vector.load %arg3[%c0_1, %c0_2] : memref<40x120xf32, #tpu.memory_space<vmem>>, vector<40x120xf32>
    %cst = arith.constant dense<0.000000e+00> : vector<40x784xf32>
    %2 = tpu.matmul %1, %0, %cst {dimension_numbers = #tpu.dot_dimension_numbers<[1], [0], [0], [1], [0, 0, 1, 1], [], []>} : vector<40x120xf32>, vector<120x784xf32>, vector<40x784xf32> -> vector<40x784xf32>
    %cst_3 = arith.constant dense<0.000000e+00> : vector<40xf32>
    %3 = vector.multi_reduction <add>, %2, %cst_3 [1] : vector<40x784xf32> to vector<40xf32>
    %4 = vector.shape_cast %3 : vector<40xf32> to vector<40x1xf32>
    %cst_4 = arith.constant 0.00127551018 : f32
    %5 = vector.broadcast %cst_4 : f32 to vector<40x1xf32>
    %6 = arith.mulf %4, %5 : vector<40x1xf32>
    %7 = vector.broadcast %6 : vector<40x1xf32> to vector<40x784xf32>
    %8 = arith.subf %2, %7 : vector<40x784xf32>
    %9 = arith.mulf %8, %8 : vector<40x784xf32>
    %cst_5 = arith.constant dense<0.000000e+00> : vector<40xf32>
    %10 = vector.multi_reduction <add>, %9, %cst_5 [1] : vector<40x784xf32> to vector<40xf32>
    %11 = vector.shape_cast %10 : vector<40xf32> to vector<40x1xf32>
    %cst_6 = arith.constant 0.00127551018 : f32
    %12 = vector.broadcast %cst_6 : f32 to vector<40x1xf32>
    %13 = arith.mulf %11, %12 : vector<40x1xf32>
    %c0_7 = arith.constant 0 : index
    %c0_8 = arith.constant 0 : index
    %14 = vector.load %arg5[%c0_7, %c0_8] : memref<40x1xf32, #tpu.memory_space<vmem>>, vector<40x1xf32>
    %cst_9 = arith.constant 1.000000e-03 : f32
    %15 = vector.broadcast %cst_9 : f32 to vector<40x1xf32>
    %16 = arith.addf %13, %15 : vector<40x1xf32>
    %17 = math.rsqrt %16 : vector<40x1xf32>
    %18 = arith.mulf %14, %17 : vector<40x1xf32>
    %19 = vector.broadcast %18 : vector<40x1xf32> to vector<40x784xf32>
    %20 = arith.mulf %19, %8 : vector<40x784xf32>
    %c0_10 = arith.constant 0 : index
    %c0_11 = arith.constant 0 : index
    %21 = vector.load %arg6[%c0_10, %c0_11] : memref<40x1xf32, #tpu.memory_space<vmem>>, vector<40x1xf32>
    %22 = vector.broadcast %21 : vector<40x1xf32> to vector<40x784xf32>
    %23 = arith.addf %20, %22 : vector<40x784xf32>
    %c0_12 = arith.constant 0 : index
    %c0_13 = arith.constant 0 : index
    %24 = vector.load %arg2[%c0_12, %c0_13] : memref<40x784xf32, #tpu.memory_space<vmem>>, vector<40x784xf32>
    %25 = arith.addf %23, %24 : vector<40x784xf32>
    %c0_14 = arith.constant 0 : index
    %c0_15 = arith.constant 0 : index
    %26 = vector.load %arg4[%c0_14, %c0_15] : memref<240x40xf32, #tpu.memory_space<vmem>>, vector<240x40xf32>
    %cst_16 = arith.constant dense<0.000000e+00> : vector<240x784xf32>
    %27 = tpu.matmul %26, %25, %cst_16 {dimension_numbers = #tpu.dot_dimension_numbers<[1], [0], [0], [1], [0, 0, 1, 1], [], []>} : vector<240x40xf32>, vector<40x784xf32>, vector<240x784xf32> -> vector<240x784xf32>
    %c0_17 = arith.constant 0 : index
    %c0_18 = arith.constant 0 : index
    %28 = vector.load %arg7[%c0_17, %c0_18] : memref<240x784xf32, #tpu.memory_space<vmem>>, vector<240x784xf32>
    tpu.vector_store %arg7[%c0_17, %c0_18], %27 {strides = array<i32>} : memref<240x784xf32, #tpu.memory_space<vmem>>, vector<240x784xf32>,
    return
  }
  func.func @transform_0(%arg0: i32) -> (i32, i32) {
    %c0_i32 = arith.constant 0 : i32
    %c0_i32_0 = arith.constant 0 : i32
    %c0_i32_1 = arith.constant 0 : i32
    return %c0_i32, %c0_i32_0 : i32, i32
  }
  func.func @transform_1(%arg0: i32) -> (i32, i32) {
    %c0_i32 = arith.constant 0 : i32
    %c0_i32_0 = arith.constant 0 : i32
    %c0_i32_1 = arith.constant 0 : i32
    return %c0_i32, %c0_i32_0 : i32, i32
  }
  func.func @transform_2(%arg0: i32) -> (i32, i32) {
    %c0_i32 = arith.constant 0 : i32
    %c0_i32_0 = arith.constant 0 : i32
    %c0_i32_1 = arith.constant 0 : i32
    return %c0_i32, %c0_i32_0 : i32, i32
  }
  func.func @transform_3(%arg0: i32) -> (i32, i32) {
    %c0_i32 = arith.constant 0 : i32
    %c0_i32_0 = arith.constant 0 : i32
    %c0_i32_1 = arith.constant 0 : i32
    return %c0_i32, %c0_i32_0 : i32, i32
  }
  func.func @transform_4(%arg0: i32) -> (i32, i32) {
    %c0_i32 = arith.constant 0 : i32
    %c0_i32_0 = arith.constant 0 : i32
    %c0_i32_1 = arith.constant 0 : i32
    return %c0_i32, %c0_i32_0 : i32, i32
  }
  func.func @transform_5(%arg0: i32) -> (i32, i32) {
    %c0_i32 = arith.constant 0 : i32
    %c0_i32_0 = arith.constant 0 : i32
    %c0_i32_1 = arith.constant 0 : i32
    return %c0_i32, %c0_i32_0 : i32, i32
  }
  func.func @transform_6(%arg0: i32) -> (i32, i32) {
    %c0_i32 = arith.constant 0 : i32
    %c0_i32_0 = arith.constant 0 : i32
    %c0_i32_1 = arith.constant 0 : i32
    return %c0_i32, %c0_i32_0 : i32, i32
  }
}

</mosaic_0001>

<llo_original>
// kernel: tpu_custom_call.1
$region0: #{tpu_custom_call.1}
  #allocation0 [shape = 'u32[]', space=smem, size = 0x4, offset = 0x4, fixed_abs, tag = 'smem constant byte address 0x4 - core index']
  #allocation1 [shape = 'u32[72,128]{1,0:T(1,128)}', space=vmem, size = 0x9000, scoped, tag = 'internal scratch']
  %s0 = inlined_call_operand.vmem [shape: f32[120,784], index: 0, kind: input, shape index: {}]
  %s1 = inlined_call_operand.vmem [shape: f32[40,784], index: 1, kind: input, shape index: {}]
  %s2 = inlined_call_operand.vmem [shape: f32[40,120], index: 2, kind: input, shape index: {}]
  %s3 = inlined_call_operand.vmem [shape: f32[240,40], index: 3, kind: input, shape index: {}]
  %s4 = inlined_call_operand.vmem [shape: f32[40,1], index: 4, kind: input, shape index: {}]
  %s5 = inlined_call_operand.vmem [shape: f32[40,1], index: 5, kind: input, shape index: {}]
  %s6 = inlined_call_operand.vmem [shape: f32[240,784], index: 6, kind: output, shape index: {}]
  %s7 = sld [smem:[#allocation0]]
  $region34: #{tpu_custom_call.1} parent=0
    _
  %s9 = ssub.s32 1, %s7
  %s10 = scalar_select 0, %s9, %s7
  // Predicated region
  $region2: #{tpu_custom_call.1} parent=0 // pred_check
    _
  $region3: #{tpu_custom_call.1} parent=0 // pred_check_branch
    %12 = sbr.rel (0) target = $region5
  $region4: #{tpu_custom_call.1} parent=0 // pred_region
    _
  $region5: #{tpu_custom_call.1} parent=0 // pred_fallthru
    _
  // Predicated region
  $region6: #{tpu_custom_call.1} parent=0 // pred_check
    _
  $region7: #{tpu_custom_call.1} parent=0 // pred_check_branch
    %14 = sbr.rel (0) target = $region9
  $region8: #{tpu_custom_call.1} parent=0 // pred_region
    _
  $region9: #{tpu_custom_call.1} parent=0 // pred_fallthru
    _
  // Predicated region
  $region10: #{tpu_custom_call.1} parent=0 // pred_check
    _
  $region11: #{tpu_custom_call.1} parent=0 // pred_check_branch
    %16 = sbr.rel (0) target = $region13
  $region12: #{tpu_custom_call.1} parent=0 // pred_region
    _
  $region13: #{tpu_custom_call.1} parent=0 // pred_fallthru
    _
  // Predicated region
  $region14: #{tpu_custom_call.1} parent=0 // pred_check
    _
  $region15: #{tpu_custom_call.1} parent=0 // pred_check_branch
    %18 = sbr.rel (0) target = $region17
  $region16: #{tpu_custom_call.1} parent=0 // pred_region
    _
  $region17: #{tpu_custom_call.1} parent=0 // pred_fallthru
    _
  // Predicated region
  $region18: #{tpu_custom_call.1} parent=0 // pred_check
    _
  $region19: #{tpu_custom_call.1} parent=0 // pred_check_branch
    %20 = sbr.rel (0) target = $region21
  $region20: #{tpu_custom_call.1} parent=0 // pred_region
    _
  $region21: #{tpu_custom_call.1} parent=0 // pred_fallthru
    _
  // Predicated region
  $region22: #{tpu_custom_call.1} parent=0 // pred_check
    _
  $region23: #{tpu_custom_call.1} parent=0 // pred_check_branch
    %22 = sbr.rel (0) target = $region25
  $region24: #{tpu_custom_call.1} parent=0 // pred_region
    _
  $region25: #{tpu_custom_call.1} parent=0 // pred_fallthru
    _
  %v23 = vld [vmem:[%s0] sm:$0xff]
  %v24 = vld [vmem:[%s0 + $0x8] sm:$0xff]
  %v25 = vld [vmem:[%s0 + $0x10] sm:$0xff]
  %v26 = vld [vmem:[%s0 + $0x18] sm:$0xff]
  %v27 = vld [vmem:[%s0 + $0x20] sm:$0xff]
  %v28 = vld [vmem:[%s0 + $0x28] sm:$0xff]
  %v29 = vld [vmem:[%s0 + $0x30] sm:$0xff]
  %v30 = vld [vmem:[%s0 + $0x38] sm:$0xff]
  %v31 = vld [vmem:[%s0 + $0x40] sm:$0xff]
  %v32 = vld [vmem:[%s0 + $0x48] sm:$0xff]
  %v33 = vld [vmem:[%s0 + $0x50] sm:$0xff]
  %v34 = vld [vmem:[%s0 + $0x58] sm:$0xff]
  %v35 = vld [vmem:[%s0 + $0x60] sm:$0xff]
  %v36 = vld [vmem:[%s0 + $0x68] sm:$0xff]
  %v37 = vld [vmem:[%s0 + $0x70] sm:$0xff]
  %v38 = vld [vmem:[%s0 + $0x78] sm:$0xff]
  %v39 = vld [vmem:[%s0 + $0x80] sm:$0xff]
  %v40 = vld [vmem:[%s0 + $0x88] sm:$0xff]
  %v41 = vld [vmem:[%s0 + $0x90] sm:$0xff]
  %v42 = vld [vmem:[%s0 + $0x98] sm:$0xff]
  %v43 = vld [vmem:[%s0 + $0xa0] sm:$0xff]
  %v44 = vld [vmem:[%s0 + $0xa8] sm:$0xff]
  %v45 = vld [vmem:[%s0 + $0xb0] sm:$0xff]
  %v46 = vld [vmem:[%s0 + $0xb8] sm:$0xff]
  %v47 = vld [vmem:[%s0 + $0xc0] sm:$0xff]
  %v48 = vld [vmem:[%s0 + $0xc8] sm:$0xff]
  %v49 = vld [vmem:[%s0 + $0xd0] sm:$0xff]
  %v50 = vld [vmem:[%s0 + $0xd8] sm:$0xff]
  %v51 = vld [vmem:[%s0 + $0xe0] sm:$0xff]
  %v52 = vld [vmem:[%s0 + $0xe8] sm:$0xff]
  %v53 = vld [vmem:[%s0 + $0xf0] sm:$0xff]
  %v54 = vld [vmem:[%s0 + $0xf8] sm:$0xff]
  %v55 = vld [vmem:[%s0 + $0x100] sm:$0xff]
  %v56 = vld [vmem:[%s0 + $0x108] sm:$0xff]
  %v57 = vld [vmem:[%s0 + $0x110] sm:$0xff]
  %v58 = vld [vmem:[%s0 + $0x118] sm:$0xff]
  %v59 = vld [vmem:[%s0 + $0x120] sm:$0xff]
  %v60 = vld [vmem:[%s0 + $0x128] sm:$0xff]
  %v61 = vld [vmem:[%s0 + $0x130] sm:$0xff]
  %v62 = vld [vmem:[%s0 + $0x138] sm:$0xff]
  %v63 = vld [vmem:[%s0 + $0x140] sm:$0xff]
  %v64 = vld [vmem:[%s0 + $0x148] sm:$0xff]
  %v65 = vld [vmem:[%s0 + $0x150] sm:$0xff]
  %v66 = vld [vmem:[%s0 + $0x158] sm:$0xff]
  %v67 = vld [vmem:[%s0 + $0x160] sm:$0xff]
  %v68 = vld [vmem:[%s0 + $0x168] sm:$0xff]
  %v69 = vld [vmem:[%s0 + $0x170] sm:$0xff]
  %v70 = vld [vmem:[%s0 + $0x178] sm:$0xff]
  %v71 = vld [vmem:[%s0 + $0x180] sm:$0xff]
  %v72 = vld [vmem:[%s0 + $0x188] sm:$0xff]
  %v73 = vld [vmem:[%s0 + $0x190] sm:$0xff]
  %v74 = vld [vmem:[%s0 + $0x198] sm:$0xff]
  %v75 = vld [vmem:[%s0 + $0x1a0] sm:$0xff]
  %v76 = vld [vmem:[%s0 + $0x1a8] sm:$0xff]
  %v77 = vld [vmem:[%s0 + $0x1b0] sm:$0xff]
  %v78 = vld [vmem:[%s0 + $0x1b8] sm:$0xff]
  %v79 = vld [vmem:[%s0 + $0x1c0] sm:$0xff]
  %v80 = vld [vmem:[%s0 + $0x1c8] sm:$0xff]
  %v81 = vld [vmem:[%s0 + $0x1d0] sm:$0xff]
  %v82 = vld [vmem:[%s0 + $0x1d8] sm:$0xff]
  %v83 = vld [vmem:[%s0 + $0x1e0] sm:$0xff]
  %v84 = vld [vmem:[%s0 + $0x1e8] sm:$0xff]
  %v85 = vld [vmem:[%s0 + $0x1f0] sm:$0xff]
  %v86 = vld [vmem:[%s0 + $0x1f8] sm:$0xff]
  %v87 = vld [vmem:[%s0 + $0x200] sm:$0xff]
  %v88 = vld [vmem:[%s0 + $0x208] sm:$0xff]
  %v89 = vld [vmem:[%s0 + $0x210] sm:$0xff]
  %v90 = vld [vmem:[%s0 + $0x218] sm:$0xff]
  %v91 = vld [vmem:[%s0 + $0x220] sm:$0xff]
  %v92 = vld [vmem:[%s0 + $0x228] sm:$0xff]
  %v93 = vld [vmem:[%s0 + $0x230] sm:$0xff]
  %v94 = vld [vmem:[%s0 + $0x238] sm:$0xff]
  %v95 = vld [vmem:[%s0 + $0x240] sm:$0xff]
  %v96 = vld [vmem:[%s0 + $0x248] sm:$0xff]
  %v97 = vld [vmem:[%s0 + $0x250] sm:$0xff]
  %v98 = vld [vmem:[%s0 + $0x258] sm:$0xff]
  %v99 = vld [vmem:[%s0 + $0x260] sm:$0xff]
  %v100 = vld [vmem:[%s0 + $0x268] sm:$0xff]
  %v101 = vld [vmem:[%s0 + $0x270] sm:$0xff]
  %v102 = vld [vmem:[%s0 + $0x278] sm:$0xff]
  %v103 = vld [vmem:[%s0 + $0x280] sm:$0xff]
  %v104 = vld [vmem:[%s0 + $0x288] sm:$0xff]
  %v105 = vld [vmem:[%s0 + $0x290] sm:$0xff]
  %v106 = vld [vmem:[%s0 + $0x298] sm:$0xff]
  %v107 = vld [vmem:[%s0 + $0x2a0] sm:$0xff]
  %v108 = vld [vmem:[%s0 + $0x2a8] sm:$0xff]
  %v109 = vld [vmem:[%s0 + $0x2b0] sm:$0xff]
  %v110 = vld [vmem:[%s0 + $0x2b8] sm:$0xff]
  %v111 = vld [vmem:[%s0 + $0x2c0] sm:$0xff]
  %v112 = vld [vmem:[%s0 + $0x2c8] sm:$0xff]
  %v113 = vld [vmem:[%s0 + $0x2d0] sm:$0xff]
  %v114 = vld [vmem:[%s0 + $0x2d8] sm:$0xff]
  %v115 = vld [vmem:[%s0 + $0x2e0] sm:$0xff]
  %v116 = vld [vmem:[%s0 + $0x2e8] sm:$0xff]
  %v117 = vld [vmem:[%s0 + $0x2f0] sm:$0xff]
  %v118 = vld [vmem:[%s0 + $0x2f8] sm:$0xff]
  %v119 = vld [vmem:[%s0 + $0x300] sm:$0xff]
  %v120 = vld [vmem:[%s0 + $0x308] sm:$0xff]
  %v121 = vld [vmem:[%s0 + $0x310] sm:$0xff]
  %v122 = vld [vmem:[%s0 + $0x318] sm:$0xff]
  %v123 = vld [vmem:[%s0 + $0x320] sm:$0xff]
  %v124 = vld [vmem:[%s0 + $0x328] sm:$0xff]
  %v125 = vld [vmem:[%s0 + $0x330] sm:$0xff]
  %v126 = vld [vmem:[%s0 + $0x338] sm:$0xff]
  %v127 = vld [vmem:[%s0 + $0x340] sm:$0xff]
  %v128 = vld [vmem:[%s2] sm:$0xff]
  %v129 = vld [vmem:[%s2 + $0x8] sm:$0xff]
  %v130 = vld [vmem:[%s2 + $0x10] sm:$0xff]
  %v131 = vld [vmem:[%s2 + $0x18] sm:$0xff]
  %v132 = vld [vmem:[%s2 + $0x20] sm:$0xff]
  %vm133 = vcmask 982016
  %v135 = vsel %vm133, %v128, 0
  %v138 = vsel %vm133, %v129, 0
  %v141 = vsel %vm133, %v130, 0
  %v144 = vsel %vm133, %v131, 0
  %v147 = vsel %vm133, %v132, 0
  %149 = vmatpush.msra.mxu0 0.0
  %150 = vmatpush.msra.mxu0 %v121
  %151 = vmatpush.msra.mxu0 %v114
  %152 = vmatpush.msra.mxu0 %v107
  %153 = vmatpush.msra.mxu0 %v100
  %154 = vmatpush.msra.mxu0 %v93
  %155 = vmatpush.msra.mxu0 %v86
  %156 = vmatpush.msra.mxu0 %v79
  %157 = vmatpush.msra.mxu0 %v72
  %158 = vmatpush.msra.mxu0 %v65
  %159 = vmatpush.msra.mxu0 %v58
  %160 = vmatpush.msra.mxu0 %v51
  %161 = vmatpush.msra.mxu0 %v44
  %162 = vmatpush.msra.mxu0 %v37
  %163 = vmatpush.msra.mxu0 %v30
  %164 = vmatpush.msra.mxu0 %v23
  %165 = vmatmul.f32.gmra.mxu0 %v135
  %v166 = vpop.f32.mrf.mxu0
  %v167 = vadd.f32 0.0, %v166
  %168 = vmatmul.f32.gmra.mxu0 %v138
  %v169 = vpop.f32.mrf.mxu0
  %v170 = vadd.f32 0.0, %v169
  %171 = vmatmul.f32.gmra.mxu0 %v141
  %v172 = vpop.f32.mrf.mxu0
  %v173 = vadd.f32 0.0, %v172
  %174 = vmatmul.f32.gmra.mxu0 %v144
  %v175 = vpop.f32.mrf.mxu0
  %v176 = vadd.f32 0.0, %v175
  %177 = vmatmul.f32.gmra.mxu0 %v147
  %v178 = vpop.f32.mrf.mxu0
  %v179 = vadd.f32 0.0, %v178
  %180 = vdwg.mxu0
  %181 = vmatpush.msra.mxu0 0.0
  %182 = vmatpush.msra.mxu0 %v122
  %183 = vmatpush.msra.mxu0 %v115
  %184 = vmatpush.msra.mxu0 %v108
  %185 = vmatpush.msra.mxu0 %v101
  %186 = vmatpush.msra.mxu0 %v94
  %187 = vmatpush.msra.mxu0 %v87
  %188 = vmatpush.msra.mxu0 %v80
  %189 = vmatpush.msra.mxu0 %v73
  %190 = vmatpush.msra.mxu0 %v66
  %191 = vmatpush.msra.mxu0 %v59
  %192 = vmatpush.msra.mxu0 %v52
  %193 = vmatpush.msra.mxu0 %v45
  %194 = vmatpush.msra.mxu0 %v38
  %195 = vmatpush.msra.mxu0 %v31
  %196 = vmatpush.msra.mxu0 %v24
  %197 = vmatmul.f32.gmra.mxu0 %v135
  %v198 = vpop.f32.mrf.mxu0
  %v199 = vadd.f32 0.0, %v198
  %200 = vmatmul.f32.gmra.mxu0 %v138
  %v201 = vpop.f32.mrf.mxu0
  %v202 = vadd.f32 0.0, %v201
  %203 = vmatmul.f32.gmra.mxu0 %v141
  %v204 = vpop.f32.mrf.mxu0
  %v205 = vadd.f32 0.0, %v204
  %206 = vmatmul.f32.gmra.mxu0 %v144
  %v207 = vpop.f32.mrf.mxu0
  %v208 = vadd.f32 0.0, %v207
  %209 = vmatmul.f32.gmra.mxu0 %v147
  %v210 = vpop.f32.mrf.mxu0
  %v211 = vadd.f32 0.0, %v210
  %212 = vdwg.mxu0
  %213 = vmatpush.msra.mxu0 0.0
  %214 = vmatpush.msra.mxu0 %v123
  %215 = vmatpush.msra.mxu0 %v116
  %216 = vmatpush.msra.mxu0 %v109
  %217 = vmatpush.msra.mxu0 %v102
  %218 = vmatpush.msra.mxu0 %v95
  %219 = vmatpush.msra.mxu0 %v88
  %220 = vmatpush.msra.mxu0 %v81
  %221 = vmatpush.msra.mxu0 %v74
  %222 = vmatpush.msra.mxu0 %v67
  %223 = vmatpush.msra.mxu0 %v60
  %224 = vmatpush.msra.mxu0 %v53
  %225 = vmatpush.msra.mxu0 %v46
  %226 = vmatpush.msra.mxu0 %v39
  %227 = vmatpush.msra.mxu0 %v32
  %228 = vmatpush.msra.mxu0 %v25
  %229 = vmatmul.f32.gmra.mxu0 %v135
  %v230 = vpop.f32.mrf.mxu0
  %v231 = vadd.f32 0.0, %v230
  %232 = vmatmul.f32.gmra.mxu0 %v138
  %v233 = vpop.f32.mrf.mxu0
  %v234 = vadd.f32 0.0, %v233
  %235 = vmatmul.f32.gmra.mxu0 %v141
  %v236 = vpop.f32.mrf.mxu0
  %v237 = vadd.f32 0.0, %v236
  %238 = vmatmul.f32.gmra.mxu0 %v144
  %v239 = vpop.f32.mrf.mxu0
  %v240 = vadd.f32 0.0, %v239
  %241 = vmatmul.f32.gmra.mxu0 %v147
  %v242 = vpop.f32.mrf.mxu0
  %v243 = vadd.f32 0.0, %v242
  %244 = vdwg.mxu0
  %245 = vmatpush.msra.mxu0 0.0
  %246 = vmatpush.msra.mxu0 %v124
  %247 = vmatpush.msra.mxu0 %v117
  %248 = vmatpush.msra.mxu0 %v110
  %249 = vmatpush.msra.mxu0 %v103
  %250 = vmatpush.msra.mxu0 %v96
  %251 = vmatpush.msra.mxu0 %v89
  %252 = vmatpush.msra.mxu0 %v82
  %253 = vmatpush.msra.mxu0 %v75
  %254 = vmatpush.msra.mxu0 %v68
  %255 = vmatpush.msra.mxu0 %v61
  %256 = vmatpush.msra.mxu0 %v54
  %257 = vmatpush.msra.mxu0 %v47
  %258 = vmatpush.msra.mxu0 %v40
  %259 = vmatpush.msra.mxu0 %v33
  %260 = vmatpush.msra.mxu0 %v26
  %261 = vmatmul.f32.gmra.mxu0 %v135
  %v262 = vpop.f32.mrf.mxu0
  %v263 = vadd.f32 0.0, %v262
  %264 = vmatmul.f32.gmra.mxu0 %v138
  %v265 = vpop.f32.mrf.mxu0
  %v266 = vadd.f32 0.0, %v265
  %267 = vmatmul.f32.gmra.mxu0 %v141
  %v268 = vpop.f32.mrf.mxu0
  %v269 = vadd.f32 0.0, %v268
  %270 = vmatmul.f32.gmra.mxu0 %v144
  %v271 = vpop.f32.mrf.mxu0
  %v272 = vadd.f32 0.0, %v271
  %273 = vmatmul.f32.gmra.mxu0 %v147
  %v274 = vpop.f32.mrf.mxu0
  %v275 = vadd.f32 0.0, %v274
  %276 = vdwg.mxu0
  %277 = vmatpush.msra.mxu0 0.0
  %278 = vmatpush.msra.mxu0 %v125
  %279 = vmatpush.msra.mxu0 %v118
  %280 = vmatpush.msra.mxu0 %v111
  %281 = vmatpush.msra.mxu0 %v104
  %282 = vmatpush.msra.mxu0 %v97
  %283 = vmatpush.msra.mxu0 %v90
  %284 = vmatpush.msra.mxu0 %v83
  %285 = vmatpush.msra.mxu0 %v76
  %286 = vmatpush.msra.mxu0 %v69
  %287 = vmatpush.msra.mxu0 %v62
  %288 = vmatpush.msra.mxu0 %v55
  %289 = vmatpush.msra.mxu0 %v48
  %290 = vmatpush.msra.mxu0 %v41
  %291 = vmatpush.msra.mxu0 %v34
  %292 = vmatpush.msra.mxu0 %v27
  %293 = vmatmul.f32.gmra.mxu0 %v135
  %v294 = vpop.f32.mrf.mxu0
  %v295 = vadd.f32 0.0, %v294
  %296 = vmatmul.f32.gmra.mxu0 %v138
  %v297 = vpop.f32.mrf.mxu0
  %v298 = vadd.f32 0.0, %v297
  %299 = vmatmul.f32.gmra.mxu0 %v141
  %v300 = vpop.f32.mrf.mxu0
  %v301 = vadd.f32 0.0, %v300
  %302 = vmatmul.f32.gmra.mxu0 %v144
  %v303 = vpop.f32.mrf.mxu0
  %v304 = vadd.f32 0.0, %v303
  %305 = vmatmul.f32.gmra.mxu0 %v147
  %v306 = vpop.f32.mrf.mxu0
  %v307 = vadd.f32 0.0, %v306
  %308 = vdwg.mxu0
  %309 = vmatpush.msra.mxu0 0.0
  %310 = vmatpush.msra.mxu0 %v126
  %311 = vmatpush.msra.mxu0 %v119
  %312 = vmatpush.msra.mxu0 %v112
  %313 = vmatpush.msra.mxu0 %v105
  %314 = vmatpush.msra.mxu0 %v98
  %315 = vmatpush.msra.mxu0 %v91
  %316 = vmatpush.msra.mxu0 %v84
  %317 = vmatpush.msra.mxu0 %v77
  %318 = vmatpush.msra.mxu0 %v70
  %319 = vmatpush.msra.mxu0 %v63
  %320 = vmatpush.msra.mxu0 %v56
  %321 = vmatpush.msra.mxu0 %v49
  %322 = vmatpush.msra.mxu0 %v42
  %323 = vmatpush.msra.mxu0 %v35
  %324 = vmatpush.msra.mxu0 %v28
  %325 = vmatmul.f32.gmra.mxu0 %v135
  %v326 = vpop.f32.mrf.mxu0
  %v327 = vadd.f32 0.0, %v326
  %328 = vmatmul.f32.gmra.mxu0 %v138
  %v329 = vpop.f32.mrf.mxu0
  %v330 = vadd.f32 0.0, %v329
  %331 = vmatmul.f32.gmra.mxu0 %v141
  %v332 = vpop.f32.mrf.mxu0
  %v333 = vadd.f32 0.0, %v332
  %334 = vmatmul.f32.gmra.mxu0 %v144
  %v335 = vpop.f32.mrf.mxu0
  %v336 = vadd.f32 0.0, %v335
  %337 = vmatmul.f32.gmra.mxu0 %v147
  %v338 = vpop.f32.mrf.mxu0
  %v339 = vadd.f32 0.0, %v338
  %340 = vdwg.mxu0
  %341 = vmatpush.msra.mxu0 0.0
  %342 = vmatpush.msra.mxu0 %v127
  %343 = vmatpush.msra.mxu0 %v120
  %344 = vmatpush.msra.mxu0 %v113
  %345 = vmatpush.msra.mxu0 %v106
  %346 = vmatpush.msra.mxu0 %v99
  %347 = vmatpush.msra.mxu0 %v92
  %348 = vmatpush.msra.mxu0 %v85
  %349 = vmatpush.msra.mxu0 %v78
  %350 = vmatpush.msra.mxu0 %v71
  %351 = vmatpush.msra.mxu0 %v64
  %352 = vmatpush.msra.mxu0 %v57
  %353 = vmatpush.msra.mxu0 %v50
  %354 = vmatpush.msra.mxu0 %v43
  %355 = vmatpush.msra.mxu0 %v36
  %356 = vmatpush.msra.mxu0 %v29
  %357 = vmatmul.f32.gmra.mxu0 %v135
  %v358 = vpop.f32.mrf.mxu0
  %v359 = vadd.f32 0.0, %v358
  %360 = vmatmul.f32.gmra.mxu0 %v138
  %v361 = vpop.f32.mrf.mxu0
  %v362 = vadd.f32 0.0, %v361
  %363 = vmatmul.f32.gmra.mxu0 %v141
  %v364 = vpop.f32.mrf.mxu0
  %v365 = vadd.f32 0.0, %v364
  %366 = vmatmul.f32.gmra.mxu0 %v144
  %v367 = vpop.f32.mrf.mxu0
  %v368 = vadd.f32 0.0, %v367
  %369 = vmatmul.f32.gmra.mxu0 %v147
  %v370 = vpop.f32.mrf.mxu0
  %v371 = vadd.f32 0.0, %v370
  %372 = vdwg.mxu0
  %v373 = vadd.f32 %v167, %v199
  %v374 = vadd.f32 %v373, %v231
  %v375 = vadd.f32 %v374, %v263
  %v376 = vadd.f32 %v375, %v295
  %v377 = vadd.f32 %v376, %v327
  %vm378 = vcmask 130048
  %v379 = vsel %vm378, %v359, 0.0
  %v380 = vadd.f32 %v377, %v379
  %381 = vadd.xlane.f32.xlu0 %v380
  %v382 = vpop.xlane.xlu0 %381
  %v383 = vadd.f32 %v170, %v202
  %v384 = vadd.f32 %v383, %v234
  %v385 = vadd.f32 %v384, %v266
  %v386 = vadd.f32 %v385, %v298
  %v387 = vadd.f32 %v386, %v330
  %v388 = vsel %vm378, %v362, 0.0
  %v389 = vadd.f32 %v387, %v388
  %390 = vadd.xlane.f32.xlu0 %v389
  %v391 = vpop.xlane.xlu0 %390
  %v392 = vadd.f32 %v173, %v205
  %v393 = vadd.f32 %v392, %v237
  %v394 = vadd.f32 %v393, %v269
  %v395 = vadd.f32 %v394, %v301
  %v396 = vadd.f32 %v395, %v333
  %v397 = vsel %vm378, %v365, 0.0
  %v398 = vadd.f32 %v396, %v397
  %399 = vadd.xlane.f32.xlu0 %v398
  %v400 = vpop.xlane.xlu0 %399
  %v401 = vadd.f32 %v176, %v208
  %v402 = vadd.f32 %v401, %v240
  %v403 = vadd.f32 %v402, %v272
  %v404 = vadd.f32 %v403, %v304
  %v405 = vadd.f32 %v404, %v336
  %v406 = vsel %vm378, %v368, 0.0
  %v407 = vadd.f32 %v405, %v406
  %408 = vadd.xlane.f32.xlu0 %v407
  %v409 = vpop.xlane.xlu0 %408
  %v410 = vadd.f32 %v179, %v211
  %v411 = vadd.f32 %v410, %v243
  %v412 = vadd.f32 %v411, %v275
  %v413 = vadd.f32 %v412, %v307
  %v414 = vadd.f32 %v413, %v339
  %v415 = vsel %vm378, %v371, 0.0
  %v416 = vadd.f32 %v414, %v415
  %417 = vadd.xlane.f32.xlu0 %v416
  %v418 = vpop.xlane.xlu0 %417
  %v419 = vmul.f32 %v382, 0.0012755102
  %v420 = vmul.f32 %v391, 0.0012755102
  %v421 = vmul.f32 %v400, 0.0012755102
  %v422 = vmul.f32 %v409, 0.0012755102
  %v423 = vmul.f32 %v418, 0.0012755102
  %v424 = vsub.f32 %v167, %v419
  %v425 = vsub.f32 %v199, %v419
  %v426 = vsub.f32 %v231, %v419
  %v427 = vsub.f32 %v263, %v419
  %v428 = vsub.f32 %v295, %v419
  %v429 = vsub.f32 %v327, %v419
  %v430 = vsub.f32 %v359, %v419
  %v431 = vsub.f32 %v170, %v420
  %v432 = vsub.f32 %v202, %v420
  %v433 = vsub.f32 %v234, %v420
  %v434 = vsub.f32 %v266, %v420
  %v435 = vsub.f32 %v298, %v420
  %v436 = vsub.f32 %v330, %v420
  %v437 = vsub.f32 %v362, %v420
  %v438 = vsub.f32 %v173, %v421
  %v439 = vsub.f32 %v205, %v421
  %v440 = vsub.f32 %v237, %v421
  %v441 = vsub.f32 %v269, %v421
  %v442 = vsub.f32 %v301, %v421
  %v443 = vsub.f32 %v333, %v421
  %v444 = vsub.f32 %v365, %v421
  %v445 = vsub.f32 %v176, %v422
  %v446 = vsub.f32 %v208, %v422
  %v447 = vsub.f32 %v240, %v422
  %v448 = vsub.f32 %v272, %v422
  %v449 = vsub.f32 %v304, %v422
  %v450 = vsub.f32 %v336, %v422
  %v451 = vsub.f32 %v368, %v422
  %v452 = vsub.f32 %v179, %v423
  %v453 = vsub.f32 %v211, %v423
  %v454 = vsub.f32 %v243, %v423
  %v455 = vsub.f32 %v275, %v423
  %v456 = vsub.f32 %v307, %v423
  %v457 = vsub.f32 %v339, %v423
  %v458 = vsub.f32 %v371, %v423
  %v459 = vmul.f32 %v424, %v424
  %v460 = vmul.f32 %v425, %v425
  %v461 = vmul.f32 %v426, %v426
  %v462 = vmul.f32 %v427, %v427
  %v463 = vmul.f32 %v428, %v428
  %v464 = vmul.f32 %v429, %v429
  %v465 = vmul.f32 %v430, %v430
  %v466 = vmul.f32 %v431, %v431
  %v467 = vmul.f32 %v432, %v432
  %v468 = vmul.f32 %v433, %v433
  %v469 = vmul.f32 %v434, %v434
  %v470 = vmul.f32 %v435, %v435
  %v471 = vmul.f32 %v436, %v436
  %v472 = vmul.f32 %v437, %v437
  %v473 = vmul.f32 %v438, %v438
  %v474 = vmul.f32 %v439, %v439
  %v475 = vmul.f32 %v440, %v440
  %v476 = vmul.f32 %v441, %v441
  %v477 = vmul.f32 %v442, %v442
  %v478 = vmul.f32 %v443, %v443
  %v479 = vmul.f32 %v444, %v444
  %v480 = vmul.f32 %v445, %v445
  %v481 = vmul.f32 %v446, %v446
  %v482 = vmul.f32 %v447, %v447
  %v483 = vmul.f32 %v448, %v448
  %v484 = vmul.f32 %v449, %v449
  %v485 = vmul.f32 %v450, %v450
  %v486 = vmul.f32 %v451, %v451
  %v487 = vmul.f32 %v452, %v452
  %v488 = vmul.f32 %v453, %v453
  %v489 = vmul.f32 %v454, %v454
  %v490 = vmul.f32 %v455, %v455
  %v491 = vmul.f32 %v456, %v456
  %v492 = vmul.f32 %v457, %v457
  %v493 = vmul.f32 %v458, %v458
  %v494 = vadd.f32 %v459, %v460
  %v495 = vadd.f32 %v494, %v461
  %v496 = vadd.f32 %v495, %v462
  %v497 = vadd.f32 %v496, %v463
  %v498 = vadd.f32 %v497, %v464
  %v499 = vsel %vm378, %v465, 0.0
  %v500 = vadd.f32 %v498, %v499
  %501 = vadd.xlane.f32.xlu0 %v500
  %v502 = vpop.xlane.xlu0 %501
  %v503 = vadd.f32 %v466, %v467
  %v504 = vadd.f32 %v503, %v468
  %v505 = vadd.f32 %v504, %v469
  %v506 = vadd.f32 %v505, %v470
  %v507 = vadd.f32 %v506, %v471
  %v508 = vsel %vm378, %v472, 0.0
  %v509 = vadd.f32 %v507, %v508
  %510 = vadd.xlane.f32.xlu0 %v509
  %v511 = vpop.xlane.xlu0 %510
  %v512 = vadd.f32 %v473, %v474
  %v513 = vadd.f32 %v512, %v475
  %v514 = vadd.f32 %v513, %v476
  %v515 = vadd.f32 %v514, %v477
  %v516 = vadd.f32 %v515, %v478
  %v517 = vsel %vm378, %v479, 0.0
  %v518 = vadd.f32 %v516, %v517
  %519 = vadd.xlane.f32.xlu0 %v518
  %v520 = vpop.xlane.xlu0 %519
  %v521 = vadd.f32 %v480, %v481
  %v522 = vadd.f32 %v521, %v482
  %v523 = vadd.f32 %v522, %v483
  %v524 = vadd.f32 %v523, %v484
  %v525 = vadd.f32 %v524, %v485
  %v526 = vsel %vm378, %v486, 0.0
  %v527 = vadd.f32 %v525, %v526
  %528 = vadd.xlane.f32.xlu0 %v527
  %v529 = vpop.xlane.xlu0 %528
  %v530 = vadd.f32 %v487, %v488
  %v531 = vadd.f32 %v530, %v489
  %v532 = vadd.f32 %v531, %v490
  %v533 = vadd.f32 %v532, %v491
  %v534 = vadd.f32 %v533, %v492
  %v535 = vsel %vm378, %v493, 0.0
  %v536 = vadd.f32 %v534, %v535
  %537 = vadd.xlane.f32.xlu0 %v536
  %v538 = vpop.xlane.xlu0 %537
  %v539 = vmul.f32 %v502, 0.0012755102
  %v540 = vmul.f32 %v511, 0.0012755102
  %v541 = vmul.f32 %v520, 0.0012755102
  %v542 = vmul.f32 %v529, 0.0012755102
  %v543 = vmul.f32 %v538, 0.0012755102
  %v544 = vld [vmem:[%s4] sm:$0xff]
  %v545 = vld [vmem:[%s4 + $0x8] sm:$0xff]
  %v546 = vld [vmem:[%s4 + $0x10] sm:$0xff]
  %v547 = vld [vmem:[%s4 + $0x18] sm:$0xff]
  %v548 = vld [vmem:[%s4 + $0x20] sm:$0xff]
  %v549 = vadd.f32 %v539, 0.001
  %v550 = vadd.f32 %v540, 0.001
  %v551 = vadd.f32 %v541, 0.001
  %v552 = vadd.f32 %v542, 0.001
  %v553 = vadd.f32 %v543, 0.001
  %v554 = vrsqrt.pop %v549
  %v555 = vmul.f32 %v554, %v549
  %v556 = vmul.f32 %v555, %v554
  %v557 = vmul.f32 0.5, %v556
  %v558 = vsub.f32 1.5, %v557
  %v559 = vmul.f32 %v554, %v558
  %vm560 = vweird.f32 %v549
  %vm561 = vweird.f32 %v554
  %vm562 = vmor %vm560, %vm561
  %v563 = vsel %vm562, %v554, %v559
  %v564 = vrsqrt.pop %v550
  %v565 = vmul.f32 %v564, %v550
  %v566 = vmul.f32 %v565, %v564
  %v567 = vmul.f32 0.5, %v566
  %v568 = vsub.f32 1.5, %v567
  %v569 = vmul.f32 %v564, %v568
  %vm570 = vweird.f32 %v550
  %vm571 = vweird.f32 %v564
  %vm572 = vmor %vm570, %vm571
  %v573 = vsel %vm572, %v564, %v569
  %v574 = vrsqrt.pop %v551
  %v575 = vmul.f32 %v574, %v551
  %v576 = vmul.f32 %v575, %v574
  %v577 = vmul.f32 0.5, %v576
  %v578 = vsub.f32 1.5, %v577
  %v579 = vmul.f32 %v574, %v578
  %vm580 = vweird.f32 %v551
  %vm581 = vweird.f32 %v574
  %vm582 = vmor %vm580, %vm581
  %v583 = vsel %vm582, %v574, %v579
  %v584 = vrsqrt.pop %v552
  %v585 = vmul.f32 %v584, %v552
  %v586 = vmul.f32 %v585, %v584
  %v587 = vmul.f32 0.5, %v586
  %v588 = vsub.f32 1.5, %v587
  %v589 = vmul.f32 %v584, %v588
  %vm590 = vweird.f32 %v552
  %vm591 = vweird.f32 %v584
  %vm592 = vmor %vm590, %vm591
  %v593 = vsel %vm592, %v584, %v589
  %v594 = vrsqrt.pop %v553
  %v595 = vmul.f32 %v594, %v553
  %v596 = vmul.f32 %v595, %v594
  %v597 = vmul.f32 0.5, %v596
  %v598 = vsub.f32 1.5, %v597
  %v599 = vmul.f32 %v594, %v598
  %vm600 = vweird.f32 %v553
  %vm601 = vweird.f32 %v594
  %vm602 = vmor %vm600, %vm601
  %v603 = vsel %vm602, %v594, %v599
  %v604 = vmul.f32 %v544, %v563
  %v605 = vmul.f32 %v545, %v573
  %v606 = vmul.f32 %v546, %v583
  %v607 = vmul.f32 %v547, %v593
  %v608 = vmul.f32 %v548, %v603
  %610 = vset.pattern.permute.xlu0 0
  %611 = vperm.xlu0 %610, %v604
  %v612 = vpop.permute.xlu0 %611
  %615 = vset.pattern.permute.xlu0 0
  %616 = vperm.xlu0 %615, %v605
  %v617 = vpop.permute.xlu0 %616
  %620 = vset.pattern.permute.xlu0 0
  %621 = vperm.xlu0 %620, %v606
  %v622 = vpop.permute.xlu0 %621
  %625 = vset.pattern.permute.xlu0 0
  %626 = vperm.xlu0 %625, %v607
  %v627 = vpop.permute.xlu0 %626
  %630 = vset.pattern.permute.xlu0 0
  %631 = vperm.xlu0 %630, %v608
  %v632 = vpop.permute.xlu0 %631
  %v634 = vmul.f32 %v612, %v424
  %v635 = vmul.f32 %v612, %v425
  %v636 = vmul.f32 %v612, %v426
  %v637 = vmul.f32 %v612, %v427
  %v638 = vmul.f32 %v612, %v428
  %v639 = vmul.f32 %v612, %v429
  %v640 = vmul.f32 %v612, %v430
  %v641 = vmul.f32 %v617, %v431
  %v642 = vmul.f32 %v617, %v432
  %v643 = vmul.f32 %v617, %v433
  %v644 = vmul.f32 %v617, %v434
  %v645 = vmul.f32 %v617, %v435
  %v646 = vmul.f32 %v617, %v436
  %v647 = vmul.f32 %v617, %v437
  %v648 = vmul.f32 %v622, %v438
  %v649 = vmul.f32 %v622, %v439
  %v650 = vmul.f32 %v622, %v440
  %v651 = vmul.f32 %v622, %v441
  %v652 = vmul.f32 %v622, %v442
  %v653 = vmul.f32 %v622, %v443
  %v654 = vmul.f32 %v622, %v444
  %v655 = vmul.f32 %v627, %v445
  %v656 = vmul.f32 %v627, %v446
  %v657 = vmul.f32 %v627, %v447
  %v658 = vmul.f32 %v627, %v448
  %v659 = vmul.f32 %v627, %v449
  %v660 = vmul.f32 %v627, %v450
  %v661 = vmul.f32 %v627, %v451
  %v662 = vmul.f32 %v632, %v452
  %v663 = vmul.f32 %v632, %v453
  %v664 = vmul.f32 %v632, %v454
  %v665 = vmul.f32 %v632, %v455
  %v666 = vmul.f32 %v632, %v456
  %v667 = vmul.f32 %v632, %v457
  %v668 = vmul.f32 %v632, %v458
  %v669 = vld [vmem:[%s5] sm:$0xff]
  %v670 = vld [vmem:[%s5 + $0x8] sm:$0xff]
  %v671 = vld [vmem:[%s5 + $0x10] sm:$0xff]
  %v672 = vld [vmem:[%s5 + $0x18] sm:$0xff]
  %v673 = vld [vmem:[%s5 + $0x20] sm:$0xff]
  %675 = vset.pattern.permute.xlu0 0
  %676 = vperm.xlu0 %675, %v669
  %v677 = vpop.permute.xlu0 %676
  %680 = vset.pattern.permute.xlu0 0
  %681 = vperm.xlu0 %680, %v670
  %v682 = vpop.permute.xlu0 %681
  %685 = vset.pattern.permute.xlu0 0
  %686 = vperm.xlu0 %685, %v671
  %v687 = vpop.permute.xlu0 %686
  %690 = vset.pattern.permute.xlu0 0
  %691 = vperm.xlu0 %690, %v672
  %v692 = vpop.permute.xlu0 %691
  %695 = vset.pattern.permute.xlu0 0
  %696 = vperm.xlu0 %695, %v673
  %v697 = vpop.permute.xlu0 %696
  %v699 = vadd.f32 %v634, %v677
  %v700 = vadd.f32 %v635, %v677
  %v701 = vadd.f32 %v636, %v677
  %v702 = vadd.f32 %v637, %v677
  %v703 = vadd.f32 %v638, %v677
  %v704 = vadd.f32 %v639, %v677
  %v705 = vadd.f32 %v640, %v677
  %v706 = vadd.f32 %v641, %v682
  %v707 = vadd.f32 %v642, %v682
  %v708 = vadd.f32 %v643, %v682
  %v709 = vadd.f32 %v644, %v682
  %v710 = vadd.f32 %v645, %v682
  %v711 = vadd.f32 %v646, %v682
  %v712 = vadd.f32 %v647, %v682
  %v713 = vadd.f32 %v648, %v687
  %v714 = vadd.f32 %v649, %v687
  %v715 = vadd.f32 %v650, %v687
  %v716 = vadd.f32 %v651, %v687
  %v717 = vadd.f32 %v652, %v687
  %v718 = vadd.f32 %v653, %v687
  %v719 = vadd.f32 %v654, %v687
  %v720 = vadd.f32 %v655, %v692
  %v721 = vadd.f32 %v656, %v692
  %v722 = vadd.f32 %v657, %v692
  %v723 = vadd.f32 %v658, %v692
  %v724 = vadd.f32 %v659, %v692
  %v725 = vadd.f32 %v660, %v692
  %v726 = vadd.f32 %v661, %v692
  %v727 = vadd.f32 %v662, %v697
  %v728 = vadd.f32 %v663, %v697
  %v729 = vadd.f32 %v664, %v697
  %v730 = vadd.f32 %v665, %v697
  %v731 = vadd.f32 %v666, %v697
  %v732 = vadd.f32 %v667, %v697
  %v733 = vadd.f32 %v668, %v697
  %v734 = vld [vmem:[%s1] sm:$0xff]
  %v735 = vld [vmem:[%s1 + $0x8] sm:$0xff]
  %v736 = vld [vmem:[%s1 + $0x10] sm:$0xff]
  %v737 = vld [vmem:[%s1 + $0x18] sm:$0xff]
  %v738 = vld [vmem:[%s1 + $0x20] sm:$0xff]
  %v739 = vld [vmem:[%s1 + $0x28] sm:$0xff]
  %v740 = vld [vmem:[%s1 + $0x30] sm:$0xff]
  %v741 = vld [vmem:[%s1 + $0x38] sm:$0xff]
  %v742 = vld [vmem:[%s1 + $0x40] sm:$0xff]
  %v743 = vld [vmem:[%s1 + $0x48] sm:$0xff]
  %v744 = vld [vmem:[%s1 + $0x50] sm:$0xff]
  %v745 = vld [vmem:[%s1 + $0x58] sm:$0xff]
  %v746 = vld [vmem:[%s1 + $0x60] sm:$0xff]
  %v747 = vld [vmem:[%s1 + $0x68] sm:$0xff]
  %v748 = vld [vmem:[%s1 + $0x70] sm:$0xff]
  %v749 = vld [vmem:[%s1 + $0x78] sm:$0xff]
  %v750 = vld [vmem:[%s1 + $0x80] sm:$0xff]
  %v751 = vld [vmem:[%s1 + $0x88] sm:$0xff]
  %v752 = vld [vmem:[%s1 + $0x90] sm:$0xff]
  %v753 = vld [vmem:[%s1 + $0x98] sm:$0xff]
  %v754 = vld [vmem:[%s1 + $0xa0] sm:$0xff]
  %v755 = vld [vmem:[%s1 + $0xa8] sm:$0xff]
  %v756 = vld [vmem:[%s1 + $0xb0] sm:$0xff]
  %v757 = vld [vmem:[%s1 + $0xb8] sm:$0xff]
  %v758 = vld [vmem:[%s1 + $0xc0] sm:$0xff]
  %v759 = vld [vmem:[%s1 + $0xc8] sm:$0xff]
  %v760 = vld [vmem:[%s1 + $0xd0] sm:$0xff]
  %v761 = vld [vmem:[%s1 + $0xd8] sm:$0xff]
  %v762 = vld [vmem:[%s1 + $0xe0] sm:$0xff]
  %v763 = vld [vmem:[%s1 + $0xe8] sm:$0xff]
  %v764 = vld [vmem:[%s1 + $0xf0] sm:$0xff]
  %v765 = vld [vmem:[%s1 + $0xf8] sm:$0xff]
  %v766 = vld [vmem:[%s1 + $0x100] sm:$0xff]
  %v767 = vld [vmem:[%s1 + $0x108] sm:$0xff]
  %v768 = vld [vmem:[%s1 + $0x110] sm:$0xff]
  %v769 = vadd.f32 %v699, %v734
  %v770 = vadd.f32 %v700, %v735
  %v771 = vadd.f32 %v701, %v736
  %v772 = vadd.f32 %v702, %v737
  %v773 = vadd.f32 %v703, %v738
  %v774 = vadd.f32 %v704, %v739
  %v775 = vadd.f32 %v705, %v740
  %v776 = vadd.f32 %v706, %v741
  %v777 = vadd.f32 %v707, %v742
  %v778 = vadd.f32 %v708, %v743
  %v779 = vadd.f32 %v709, %v744
  %v780 = vadd.f32 %v710, %v745
  %v781 = vadd.f32 %v711, %v746
  %v782 = vadd.f32 %v712, %v747
  %v783 = vadd.f32 %v713, %v748
  %v784 = vadd.f32 %v714, %v749
  %v785 = vadd.f32 %v715, %v750
  %v786 = vadd.f32 %v716, %v751
  %v787 = vadd.f32 %v717, %v752
  %v788 = vadd.f32 %v718, %v753
  %v789 = vadd.f32 %v719, %v754
  %v790 = vadd.f32 %v720, %v755
  %v791 = vadd.f32 %v721, %v756
  %v792 = vadd.f32 %v722, %v757
  %v793 = vadd.f32 %v723, %v758
  %v794 = vadd.f32 %v724, %v759
  %v795 = vadd.f32 %v725, %v760
  %v796 = vadd.f32 %v726, %v761
  %v797 = vadd.f32 %v727, %v762
  %v798 = vadd.f32 %v728, %v763
  %v799 = vadd.f32 %v729, %v764
  %v800 = vadd.f32 %v730, %v765
  %v801 = vadd.f32 %v731, %v766
  %v802 = vadd.f32 %v732, %v767
  %v803 = vadd.f32 %v733, %v768
  %v804 = vld [vmem:[%s3] sm:$0xff]
  %v805 = vld [vmem:[%s3 + $0x8] sm:$0xff]
  %v806 = vld [vmem:[%s3 + $0x10] sm:$0xff]
  %v807 = vld [vmem:[%s3 + $0x18] sm:$0xff]
  %v808 = vld [vmem:[%s3 + $0x20] sm:$0xff]
  %v809 = vld [vmem:[%s3 + $0x28] sm:$0xff]
  %v810 = vld [vmem:[%s3 + $0x30] sm:$0xff]
  %v811 = vld [vmem:[%s3 + $0x38] sm:$0xff]
  %v812 = vld [vmem:[%s3 + $0x40] sm:$0xff]
  %v813 = vld [vmem:[%s3 + $0x48] sm:$0xff]
  %v814 = vld [vmem:[%s3 + $0x50] sm:$0xff]
  %v815 = vld [vmem:[%s3 + $0x58] sm:$0xff]
  %v816 = vld [vmem:[%s3 + $0x60] sm:$0xff]
  %v817 = vld [vmem:[%s3 + $0x68] sm:$0xff]
  %v818 = vld [vmem:[%s3 + $0x70] sm:$0xff]
  %v819 = vld [vmem:[%s3 + $0x78] sm:$0xff]
  %v820 = vld [vmem:[%s3 + $0x80] sm:$0xff]
  %v821 = vld [vmem:[%s3 + $0x88] sm:$0xff]
  %v822 = vld [vmem:[%s3 + $0x90] sm:$0xff]
  %v823 = vld [vmem:[%s3 + $0x98] sm:$0xff]
  %v824 = vld [vmem:[%s3 + $0xa0] sm:$0xff]
  %v825 = vld [vmem:[%s3 + $0xa8] sm:$0xff]
  %v826 = vld [vmem:[%s3 + $0xb0] sm:$0xff]
  %v827 = vld [vmem:[%s3 + $0xb8] sm:$0xff]
  %v828 = vld [vmem:[%s3 + $0xc0] sm:$0xff]
  %v829 = vld [vmem:[%s3 + $0xc8] sm:$0xff]
  %v830 = vld [vmem:[%s3 + $0xd0] sm:$0xff]
  %v831 = vld [vmem:[%s3 + $0xd8] sm:$0xff]
  %v832 = vld [vmem:[%s3 + $0xe0] sm:$0xff]
  %v833 = vld [vmem:[%s3 + $0xe8] sm:$0xff]
  %vm834 = vcmask 326656
  %v836 = vsel %vm834, %v804, 0
  %v839 = vsel %vm834, %v805, 0
  %v842 = vsel %vm834, %v806, 0
  %v845 = vsel %vm834, %v807, 0
  %v848 = vsel %vm834, %v808, 0
  %v851 = vsel %vm834, %v809, 0
  %v854 = vsel %vm834, %v810, 0
  %v857 = vsel %vm834, %v811, 0
  %v860 = vsel %vm834, %v812, 0
  %v863 = vsel %vm834, %v813, 0
  %v866 = vsel %vm834, %v814, 0
  %v869 = vsel %vm834, %v815, 0
  %v872 = vsel %vm834, %v816, 0
  %v875 = vsel %vm834, %v817, 0
  %v878 = vsel %vm834, %v818, 0
  %v881 = vsel %vm834, %v819, 0
  %v884 = vsel %vm834, %v820, 0
  %v887 = vsel %vm834, %v821, 0
  %v890 = vsel %vm834, %v822, 0
  %v893 = vsel %vm834, %v823, 0
  %v896 = vsel %vm834, %v824, 0
  %v899 = vsel %vm834, %v825, 0
  %v902 = vsel %vm834, %v826, 0
  %v905 = vsel %vm834, %v827, 0
  %v908 = vsel %vm834, %v828, 0
  %v911 = vsel %vm834, %v829, 0
  %v914 = vsel %vm834, %v830, 0
  %v917 = vsel %vm834, %v831, 0
  %v920 = vsel %vm834, %v832, 0
  %v923 = vsel %vm834, %v833, 0
  %925 = vmatpush.msra.mxu0 0.0
  %926 = vmatpush.msra.mxu0 0.0
  %927 = vmatpush.msra.mxu0 0.0
  %928 = vmatpush.msra.mxu0 0.0
  %929 = vmatpush.msra.mxu0 0.0
  %930 = vmatpush.msra.mxu0 0.0
  %931 = vmatpush.msra.mxu0 0.0
  %932 = vmatpush.msra.mxu0 0.0
  %933 = vmatpush.msra.mxu0 0.0
  %934 = vmatpush.msra.mxu0 0.0
  %935 = vmatpush.msra.mxu0 0.0
  %936 = vmatpush.msra.mxu0 %v797
  %937 = vmatpush.msra.mxu0 %v790
  %938 = vmatpush.msra.mxu0 %v783
  %939 = vmatpush.msra.mxu0 %v776
  %940 = vmatpush.msra.mxu0 %v769
  %941 = vmatmul.f32.gmra.mxu0 %v836
  %v942 = vpop.f32.mrf.mxu0
  %v943 = vadd.f32 0.0, %v942
  %944 = vmatmul.f32.gmra.mxu0 %v839
  %v945 = vpop.f32.mrf.mxu0
  %v946 = vadd.f32 0.0, %v945
  %947 = vmatmul.f32.gmra.mxu0 %v842
  %v948 = vpop.f32.mrf.mxu0
  %v949 = vadd.f32 0.0, %v948
  %950 = vmatmul.f32.gmra.mxu0 %v845
  %v951 = vpop.f32.mrf.mxu0
  %v952 = vadd.f32 0.0, %v951
  %953 = vmatmul.f32.gmra.mxu0 %v848
  %v954 = vpop.f32.mrf.mxu0
  %v955 = vadd.f32 0.0, %v954
  %956 = vmatmul.f32.gmra.mxu0 %v851
  %v957 = vpop.f32.mrf.mxu0
  %v958 = vadd.f32 0.0, %v957
  %959 = vmatmul.f32.gmra.mxu0 %v854
  %v960 = vpop.f32.mrf.mxu0
  %v961 = vadd.f32 0.0, %v960
  %962 = vmatmul.f32.gmra.mxu0 %v857
  %v963 = vpop.f32.mrf.mxu0
  %v964 = vadd.f32 0.0, %v963
  %965 = vmatmul.f32.gmra.mxu0 %v860
  %v966 = vpop.f32.mrf.mxu0
  %v967 = vadd.f32 0.0, %v966
  %968 = vmatmul.f32.gmra.mxu0 %v863
  %v969 = vpop.f32.mrf.mxu0
  %v970 = vadd.f32 0.0, %v969
  %971 = vmatmul.f32.gmra.mxu0 %v866
  %v972 = vpop.f32.mrf.mxu0
  %v973 = vadd.f32 0.0, %v972
  %974 = vmatmul.f32.gmra.mxu0 %v869
  %v975 = vpop.f32.mrf.mxu0
  %v976 = vadd.f32 0.0, %v975
  %977 = vmatmul.f32.gmra.mxu0 %v872
  %v978 = vpop.f32.mrf.mxu0
  %v979 = vadd.f32 0.0, %v978
  %980 = vmatmul.f32.gmra.mxu0 %v875
  %v981 = vpop.f32.mrf.mxu0
  %v982 = vadd.f32 0.0, %v981
  %983 = vmatmul.f32.gmra.mxu0 %v878
  %v984 = vpop.f32.mrf.mxu0
  %v985 = vadd.f32 0.0, %v984
  %986 = vmatmul.f32.gmra.mxu0 %v881
  %v987 = vpop.f32.mrf.mxu0
  %v988 = vadd.f32 0.0, %v987
  %989 = vmatmul.f32.gmra.mxu0 %v884
  %v990 = vpop.f32.mrf.mxu0
  %v991 = vadd.f32 0.0, %v990
  %992 = vmatmul.f32.gmra.mxu0 %v887
  %v993 = vpop.f32.mrf.mxu0
  %v994 = vadd.f32 0.0, %v993
  %995 = vmatmul.f32.gmra.mxu0 %v890
  %v996 = vpop.f32.mrf.mxu0
  %v997 = vadd.f32 0.0, %v996
  %998 = vmatmul.f32.gmra.mxu0 %v893
  %v999 = vpop.f32.mrf.mxu0
  %v1000 = vadd.f32 0.0, %v999
  %1001 = vmatmul.f32.gmra.mxu0 %v896
  %v1002 = vpop.f32.mrf.mxu0
  %v1003 = vadd.f32 0.0, %v1002
  %1004 = vmatmul.f32.gmra.mxu0 %v899
  %v1005 = vpop.f32.mrf.mxu0
  %v1006 = vadd.f32 0.0, %v1005
  %1007 = vmatmul.f32.gmra.mxu0 %v902
  %v1008 = vpop.f32.mrf.mxu0
  %v1009 = vadd.f32 0.0, %v1008
  %1010 = vmatmul.f32.gmra.mxu0 %v905
  %v1011 = vpop.f32.mrf.mxu0
  %v1012 = vadd.f32 0.0, %v1011
  %1013 = vmatmul.f32.gmra.mxu0 %v908
  %v1014 = vpop.f32.mrf.mxu0
  %v1015 = vadd.f32 0.0, %v1014
  %1016 = vmatmul.f32.gmra.mxu0 %v911
  %v1017 = vpop.f32.mrf.mxu0
  %v1018 = vadd.f32 0.0, %v1017
  %1019 = vmatmul.f32.gmra.mxu0 %v914
  %v1020 = vpop.f32.mrf.mxu0
  %v1021 = vadd.f32 0.0, %v1020
  %1022 = vmatmul.f32.gmra.mxu0 %v917
  %v1023 = vpop.f32.mrf.mxu0
  %v1024 = vadd.f32 0.0, %v1023
  %1025 = vmatmul.f32.gmra.mxu0 %v920
  %v1026 = vpop.f32.mrf.mxu0
  %v1027 = vadd.f32 0.0, %v1026
  %1028 = vmatmul.f32.gmra.mxu0 %v923
  %v1029 = vpop.f32.mrf.mxu0
  %v1030 = vadd.f32 0.0, %v1029
  %1031 = vdwg.mxu0
  %1032 = vmatpush.msra.mxu0 0.0
  %1033 = vmatpush.msra.mxu0 0.0
  %1034 = vmatpush.msra.mxu0 0.0
  %1035 = vmatpush.msra.mxu0 0.0
  %1036 = vmatpush.msra.mxu0 0.0
  %1037 = vmatpush.msra.mxu0 0.0
  %1038 = vmatpush.msra.mxu0 0.0
  %1039 = vmatpush.msra.mxu0 0.0
  %1040 = vmatpush.msra.mxu0 0.0
  %1041 = vmatpush.msra.mxu0 0.0
  %1042 = vmatpush.msra.mxu0 0.0
  %1043 = vmatpush.msra.mxu0 %v798
  %1044 = vmatpush.msra.mxu0 %v791
  %1045 = vmatpush.msra.mxu0 %v784
  %1046 = vmatpush.msra.mxu0 %v777
  %1047 = vmatpush.msra.mxu0 %v770
  %1048 = vmatmul.f32.gmra.mxu0 %v836
  %v1049 = vpop.f32.mrf.mxu0
  %v1050 = vadd.f32 0.0, %v1049
  %1051 = vmatmul.f32.gmra.mxu0 %v839
  %v1052 = vpop.f32.mrf.mxu0
  %v1053 = vadd.f32 0.0, %v1052
  %1054 = vmatmul.f32.gmra.mxu0 %v842
  %v1055 = vpop.f32.mrf.mxu0
  %v1056 = vadd.f32 0.0, %v1055
  %1057 = vmatmul.f32.gmra.mxu0 %v845
  %v1058 = vpop.f32.mrf.mxu0
  %v1059 = vadd.f32 0.0, %v1058
  %1060 = vmatmul.f32.gmra.mxu0 %v848
  %v1061 = vpop.f32.mrf.mxu0
  %v1062 = vadd.f32 0.0, %v1061
  %1063 = vmatmul.f32.gmra.mxu0 %v851
  %v1064 = vpop.f32.mrf.mxu0
  %v1065 = vadd.f32 0.0, %v1064
  %1066 = vmatmul.f32.gmra.mxu0 %v854
  %v1067 = vpop.f32.mrf.mxu0
  %v1068 = vadd.f32 0.0, %v1067
  %1069 = vmatmul.f32.gmra.mxu0 %v857
  %v1070 = vpop.f32.mrf.mxu0
  %v1071 = vadd.f32 0.0, %v1070
  %1072 = vmatmul.f32.gmra.mxu0 %v860
  %v1073 = vpop.f32.mrf.mxu0
  %v1074 = vadd.f32 0.0, %v1073
  %1075 = vmatmul.f32.gmra.mxu0 %v863
  %v1076 = vpop.f32.mrf.mxu0
  %v1077 = vadd.f32 0.0, %v1076
  %1078 = vmatmul.f32.gmra.mxu0 %v866
  %v1079 = vpop.f32.mrf.mxu0
  %v1080 = vadd.f32 0.0, %v1079
  %1081 = vmatmul.f32.gmra.mxu0 %v869
  %v1082 = vpop.f32.mrf.mxu0
  %v1083 = vadd.f32 0.0, %v1082
  %1084 = vmatmul.f32.gmra.mxu0 %v872
  %v1085 = vpop.f32.mrf.mxu0
  %v1086 = vadd.f32 0.0, %v1085
  %1087 = vmatmul.f32.gmra.mxu0 %v875
  %v1088 = vpop.f32.mrf.mxu0
  %v1089 = vadd.f32 0.0, %v1088
  %1090 = vmatmul.f32.gmra.mxu0 %v878
  %v1091 = vpop.f32.mrf.mxu0
  %v1092 = vadd.f32 0.0, %v1091
  %1093 = vmatmul.f32.gmra.mxu0 %v881
  %v1094 = vpop.f32.mrf.mxu0
  %v1095 = vadd.f32 0.0, %v1094
  %1096 = vmatmul.f32.gmra.mxu0 %v884
  %v1097 = vpop.f32.mrf.mxu0
  %v1098 = vadd.f32 0.0, %v1097
  %1099 = vmatmul.f32.gmra.mxu0 %v887
  %v1100 = vpop.f32.mrf.mxu0
  %v1101 = vadd.f32 0.0, %v1100
  %1102 = vmatmul.f32.gmra.mxu0 %v890
  %v1103 = vpop.f32.mrf.mxu0
  %v1104 = vadd.f32 0.0, %v1103
  %1105 = vmatmul.f32.gmra.mxu0 %v893
  %v1106 = vpop.f32.mrf.mxu0
  %v1107 = vadd.f32 0.0, %v1106
  %1108 = vmatmul.f32.gmra.mxu0 %v896
  %v1109 = vpop.f32.mrf.mxu0
  %v1110 = vadd.f32 0.0, %v1109
  %1111 = vmatmul.f32.gmra.mxu0 %v899
  %v1112 = vpop.f32.mrf.mxu0
  %v1113 = vadd.f32 0.0, %v1112
  %1114 = vmatmul.f32.gmra.mxu0 %v902
  %v1115 = vpop.f32.mrf.mxu0
  %v1116 = vadd.f32 0.0, %v1115
  %1117 = vmatmul.f32.gmra.mxu0 %v905
  %v1118 = vpop.f32.mrf.mxu0
  %v1119 = vadd.f32 0.0, %v1118
  %1120 = vmatmul.f32.gmra.mxu0 %v908
  %v1121 = vpop.f32.mrf.mxu0
  %v1122 = vadd.f32 0.0, %v1121
  %1123 = vmatmul.f32.gmra.mxu0 %v911
  %v1124 = vpop.f32.mrf.mxu0
  %v1125 = vadd.f32 0.0, %v1124
  %1126 = vmatmul.f32.gmra.mxu0 %v914
  %v1127 = vpop.f32.mrf.mxu0
  %v1128 = vadd.f32 0.0, %v1127
  %1129 = vmatmul.f32.gmra.mxu0 %v917
  %v1130 = vpop.f32.mrf.mxu0
  %v1131 = vadd.f32 0.0, %v1130
  %1132 = vmatmul.f32.gmra.mxu0 %v920
  %v1133 = vpop.f32.mrf.mxu0
  %v1134 = vadd.f32 0.0, %v1133
  %1135 = vmatmul.f32.gmra.mxu0 %v923
  %v1136 = vpop.f32.mrf.mxu0
  %v1137 = vadd.f32 0.0, %v1136
  %1138 = vdwg.mxu0
  %1139 = vmatpush.msra.mxu0 0.0
  %1140 = vmatpush.msra.mxu0 0.0
  %1141 = vmatpush.msra.mxu0 0.0
  %1142 = vmatpush.msra.mxu0 0.0
  %1143 = vmatpush.msra.mxu0 0.0
  %1144 = vmatpush.msra.mxu0 0.0
  %1145 = vmatpush.msra.mxu0 0.0
  %1146 = vmatpush.msra.mxu0 0.0
  %1147 = vmatpush.msra.mxu0 0.0
  %1148 = vmatpush.msra.mxu0 0.0
  %1149 = vmatpush.msra.mxu0 0.0
  %1150 = vmatpush.msra.mxu0 %v799
  %1151 = vmatpush.msra.mxu0 %v792
  %1152 = vmatpush.msra.mxu0 %v785
  %1153 = vmatpush.msra.mxu0 %v778
  %1154 = vmatpush.msra.mxu0 %v771
  %1155 = vmatmul.f32.gmra.mxu0 %v836
  %v1156 = vpop.f32.mrf.mxu0
  %v1157 = vadd.f32 0.0, %v1156
  %1158 = vmatmul.f32.gmra.mxu0 %v839
  %v1159 = vpop.f32.mrf.mxu0
  %v1160 = vadd.f32 0.0, %v1159
  %1161 = vmatmul.f32.gmra.mxu0 %v842
  %v1162 = vpop.f32.mrf.mxu0
  %v1163 = vadd.f32 0.0, %v1162
  %1164 = vmatmul.f32.gmra.mxu0 %v845
  %v1165 = vpop.f32.mrf.mxu0
  %v1166 = vadd.f32 0.0, %v1165
  %1167 = vmatmul.f32.gmra.mxu0 %v848
  %v1168 = vpop.f32.mrf.mxu0
  %v1169 = vadd.f32 0.0, %v1168
  %1170 = vmatmul.f32.gmra.mxu0 %v851
  %v1171 = vpop.f32.mrf.mxu0
  %v1172 = vadd.f32 0.0, %v1171
  %1173 = vmatmul.f32.gmra.mxu0 %v854
  %v1174 = vpop.f32.mrf.mxu0
  %v1175 = vadd.f32 0.0, %v1174
  %1176 = vmatmul.f32.gmra.mxu0 %v857
  %v1177 = vpop.f32.mrf.mxu0
  %v1178 = vadd.f32 0.0, %v1177
  %1179 = vmatmul.f32.gmra.mxu0 %v860
  %v1180 = vpop.f32.mrf.mxu0
  %v1181 = vadd.f32 0.0, %v1180
  %1182 = vmatmul.f32.gmra.mxu0 %v863
  %v1183 = vpop.f32.mrf.mxu0
  %v1184 = vadd.f32 0.0, %v1183
  %1185 = vmatmul.f32.gmra.mxu0 %v866
  %v1186 = vpop.f32.mrf.mxu0
  %v1187 = vadd.f32 0.0, %v1186
  %1188 = vmatmul.f32.gmra.mxu0 %v869
  %v1189 = vpop.f32.mrf.mxu0
  %v1190 = vadd.f32 0.0, %v1189
  %1191 = vmatmul.f32.gmra.mxu0 %v872
  %v1192 = vpop.f32.mrf.mxu0
  %v1193 = vadd.f32 0.0, %v1192
  %1194 = vmatmul.f32.gmra.mxu0 %v875
  %v1195 = vpop.f32.mrf.mxu0
  %v1196 = vadd.f32 0.0, %v1195
  %1197 = vmatmul.f32.gmra.mxu0 %v878
  %v1198 = vpop.f32.mrf.mxu0
  %v1199 = vadd.f32 0.0, %v1198
  %1200 = vmatmul.f32.gmra.mxu0 %v881
  %v1201 = vpop.f32.mrf.mxu0
  %v1202 = vadd.f32 0.0, %v1201
  %1203 = vmatmul.f32.gmra.mxu0 %v884
  %v1204 = vpop.f32.mrf.mxu0
  %v1205 = vadd.f32 0.0, %v1204
  %1206 = vmatmul.f32.gmra.mxu0 %v887
  %v1207 = vpop.f32.mrf.mxu0
  %v1208 = vadd.f32 0.0, %v1207
  %1209 = vmatmul.f32.gmra.mxu0 %v890
  %v1210 = vpop.f32.mrf.mxu0
  %v1211 = vadd.f32 0.0, %v1210
  %1212 = vmatmul.f32.gmra.mxu0 %v893
  %v1213 = vpop.f32.mrf.mxu0
  %v1214 = vadd.f32 0.0, %v1213
  %1215 = vmatmul.f32.gmra.mxu0 %v896
  %v1216 = vpop.f32.mrf.mxu0
  %v1217 = vadd.f32 0.0, %v1216
  %1218 = vmatmul.f32.gmra.mxu0 %v899
  %v1219 = vpop.f32.mrf.mxu0
  %v1220 = vadd.f32 0.0, %v1219
  %1221 = vmatmul.f32.gmra.mxu0 %v902
  %v1222 = vpop.f32.mrf.mxu0
  %v1223 = vadd.f32 0.0, %v1222
  %1224 = vmatmul.f32.gmra.mxu0 %v905
  %v1225 = vpop.f32.mrf.mxu0
  %v1226 = vadd.f32 0.0, %v1225
  %1227 = vmatmul.f32.gmra.mxu0 %v908
  %v1228 = vpop.f32.mrf.mxu0
  %v1229 = vadd.f32 0.0, %v1228
  %1230 = vmatmul.f32.gmra.mxu0 %v911
  %v1231 = vpop.f32.mrf.mxu0
  %v1232 = vadd.f32 0.0, %v1231
  %1233 = vmatmul.f32.gmra.mxu0 %v914
  %v1234 = vpop.f32.mrf.mxu0
  %v1235 = vadd.f32 0.0, %v1234
  %1236 = vmatmul.f32.gmra.mxu0 %v917
  %v1237 = vpop.f32.mrf.mxu0
  %v1238 = vadd.f32 0.0, %v1237
  %1239 = vmatmul.f32.gmra.mxu0 %v920
  %v1240 = vpop.f32.mrf.mxu0
  %v1241 = vadd.f32 0.0, %v1240
  %1242 = vmatmul.f32.gmra.mxu0 %v923
  %v1243 = vpop.f32.mrf.mxu0
  %v1244 = vadd.f32 0.0, %v1243
  %1245 = vdwg.mxu0
  %1246 = vmatpush.msra.mxu0 0.0
  %1247 = vmatpush.msra.mxu0 0.0
  %1248 = vmatpush.msra.mxu0 0.0
  %1249 = vmatpush.msra.mxu0 0.0
  %1250 = vmatpush.msra.mxu0 0.0
  %1251 = vmatpush.msra.mxu0 0.0
  %1252 = vmatpush.msra.mxu0 0.0
  %1253 = vmatpush.msra.mxu0 0.0
  %1254 = vmatpush.msra.mxu0 0.0
  %1255 = vmatpush.msra.mxu0 0.0
  %1256 = vmatpush.msra.mxu0 0.0
  %1257 = vmatpush.msra.mxu0 %v800
  %1258 = vmatpush.msra.mxu0 %v793
  %1259 = vmatpush.msra.mxu0 %v786
  %1260 = vmatpush.msra.mxu0 %v779
  %1261 = vmatpush.msra.mxu0 %v772
  %1262 = vmatmul.f32.gmra.mxu0 %v836
  %v1263 = vpop.f32.mrf.mxu0
  %v1264 = vadd.f32 0.0, %v1263
  %1265 = vmatmul.f32.gmra.mxu0 %v839
  %v1266 = vpop.f32.mrf.mxu0
  %v1267 = vadd.f32 0.0, %v1266
  %1268 = vmatmul.f32.gmra.mxu0 %v842
  %v1269 = vpop.f32.mrf.mxu0
  %v1270 = vadd.f32 0.0, %v1269
  %1271 = vmatmul.f32.gmra.mxu0 %v845
  %v1272 = vpop.f32.mrf.mxu0
  %v1273 = vadd.f32 0.0, %v1272
  %1274 = vmatmul.f32.gmra.mxu0 %v848
  %v1275 = vpop.f32.mrf.mxu0
  %v1276 = vadd.f32 0.0, %v1275
  %1277 = vmatmul.f32.gmra.mxu0 %v851
  %v1278 = vpop.f32.mrf.mxu0
  %v1279 = vadd.f32 0.0, %v1278
  %1280 = vmatmul.f32.gmra.mxu0 %v854
  %v1281 = vpop.f32.mrf.mxu0
  %v1282 = vadd.f32 0.0, %v1281
  %1283 = vmatmul.f32.gmra.mxu0 %v857
  %v1284 = vpop.f32.mrf.mxu0
  %v1285 = vadd.f32 0.0, %v1284
  %1286 = vmatmul.f32.gmra.mxu0 %v860
  %v1287 = vpop.f32.mrf.mxu0
  %v1288 = vadd.f32 0.0, %v1287
  %1289 = vmatmul.f32.gmra.mxu0 %v863
  %v1290 = vpop.f32.mrf.mxu0
  %v1291 = vadd.f32 0.0, %v1290
  %1292 = vmatmul.f32.gmra.mxu0 %v866
  %v1293 = vpop.f32.mrf.mxu0
  %v1294 = vadd.f32 0.0, %v1293
  %1295 = vmatmul.f32.gmra.mxu0 %v869
  %v1296 = vpop.f32.mrf.mxu0
  %v1297 = vadd.f32 0.0, %v1296
  %1298 = vmatmul.f32.gmra.mxu0 %v872
  %v1299 = vpop.f32.mrf.mxu0
  %v1300 = vadd.f32 0.0, %v1299
  %1301 = vmatmul.f32.gmra.mxu0 %v875
  %v1302 = vpop.f32.mrf.mxu0
  %v1303 = vadd.f32 0.0, %v1302
  %1304 = vmatmul.f32.gmra.mxu0 %v878
  %v1305 = vpop.f32.mrf.mxu0
  %v1306 = vadd.f32 0.0, %v1305
  %1307 = vmatmul.f32.gmra.mxu0 %v881
  %v1308 = vpop.f32.mrf.mxu0
  %v1309 = vadd.f32 0.0, %v1308
  %1310 = vmatmul.f32.gmra.mxu0 %v884
  %v1311 = vpop.f32.mrf.mxu0
  %v1312 = vadd.f32 0.0, %v1311
  %1313 = vmatmul.f32.gmra.mxu0 %v887
  %v1314 = vpop.f32.mrf.mxu0
  %v1315 = vadd.f32 0.0, %v1314
  %1316 = vmatmul.f32.gmra.mxu0 %v890
  %v1317 = vpop.f32.mrf.mxu0
  %v1318 = vadd.f32 0.0, %v1317
  %1319 = vmatmul.f32.gmra.mxu0 %v893
  %v1320 = vpop.f32.mrf.mxu0
  %v1321 = vadd.f32 0.0, %v1320
  %1322 = vmatmul.f32.gmra.mxu0 %v896
  %v1323 = vpop.f32.mrf.mxu0
  %v1324 = vadd.f32 0.0, %v1323
  %1325 = vmatmul.f32.gmra.mxu0 %v899
  %v1326 = vpop.f32.mrf.mxu0
  %v1327 = vadd.f32 0.0, %v1326
  %1328 = vmatmul.f32.gmra.mxu0 %v902
  %v1329 = vpop.f32.mrf.mxu0
  %v1330 = vadd.f32 0.0, %v1329
  %1331 = vmatmul.f32.gmra.mxu0 %v905
  %v1332 = vpop.f32.mrf.mxu0
  %v1333 = vadd.f32 0.0, %v1332
  %1334 = vmatmul.f32.gmra.mxu0 %v908
  %v1335 = vpop.f32.mrf.mxu0
  %v1336 = vadd.f32 0.0, %v1335
  %1337 = vmatmul.f32.gmra.mxu0 %v911
  %v1338 = vpop.f32.mrf.mxu0
  %v1339 = vadd.f32 0.0, %v1338
  %1340 = vmatmul.f32.gmra.mxu0 %v914
  %v1341 = vpop.f32.mrf.mxu0
  %v1342 = vadd.f32 0.0, %v1341
  %1343 = vmatmul.f32.gmra.mxu0 %v917
  %v1344 = vpop.f32.mrf.mxu0
  %v1345 = vadd.f32 0.0, %v1344
  %1346 = vmatmul.f32.gmra.mxu0 %v920
  %v1347 = vpop.f32.mrf.mxu0
  %v1348 = vadd.f32 0.0, %v1347
  %1349 = vmatmul.f32.gmra.mxu0 %v923
  %v1350 = vpop.f32.mrf.mxu0
  %v1351 = vadd.f32 0.0, %v1350
  %1352 = vdwg.mxu0
  %1353 = vmatpush.msra.mxu0 0.0
  %1354 = vmatpush.msra.mxu0 0.0
  %1355 = vmatpush.msra.mxu0 0.0
  %1356 = vmatpush.msra.mxu0 0.0
  %1357 = vmatpush.msra.mxu0 0.0
  %1358 = vmatpush.msra.mxu0 0.0
  %1359 = vmatpush.msra.mxu0 0.0
  %1360 = vmatpush.msra.mxu0 0.0
  %1361 = vmatpush.msra.mxu0 0.0
  %1362 = vmatpush.msra.mxu0 0.0
  %1363 = vmatpush.msra.mxu0 0.0
  %1364 = vmatpush.msra.mxu0 %v801
  %1365 = vmatpush.msra.mxu0 %v794
  %1366 = vmatpush.msra.mxu0 %v787
  %1367 = vmatpush.msra.mxu0 %v780
  %1368 = vmatpush.msra.mxu0 %v773
  %1369 = vmatmul.f32.gmra.mxu0 %v836
  %v1370 = vpop.f32.mrf.mxu0
  %v1371 = vadd.f32 0.0, %v1370
  %1372 = vmatmul.f32.gmra.mxu0 %v839
  %v1373 = vpop.f32.mrf.mxu0
  %v1374 = vadd.f32 0.0, %v1373
  %1375 = vmatmul.f32.gmra.mxu0 %v842
  %v1376 = vpop.f32.mrf.mxu0
  %v1377 = vadd.f32 0.0, %v1376
  %1378 = vmatmul.f32.gmra.mxu0 %v845
  %v1379 = vpop.f32.mrf.mxu0
  %v1380 = vadd.f32 0.0, %v1379
  %1381 = vmatmul.f32.gmra.mxu0 %v848
  %v1382 = vpop.f32.mrf.mxu0
  %v1383 = vadd.f32 0.0, %v1382
  %1384 = vmatmul.f32.gmra.mxu0 %v851
  %v1385 = vpop.f32.mrf.mxu0
  %v1386 = vadd.f32 0.0, %v1385
  %1387 = vmatmul.f32.gmra.mxu0 %v854
  %v1388 = vpop.f32.mrf.mxu0
  %v1389 = vadd.f32 0.0, %v1388
  %1390 = vmatmul.f32.gmra.mxu0 %v857
  %v1391 = vpop.f32.mrf.mxu0
  %v1392 = vadd.f32 0.0, %v1391
  %1393 = vmatmul.f32.gmra.mxu0 %v860
  %v1394 = vpop.f32.mrf.mxu0
  %v1395 = vadd.f32 0.0, %v1394
  %1396 = vmatmul.f32.gmra.mxu0 %v863
  %v1397 = vpop.f32.mrf.mxu0
  %v1398 = vadd.f32 0.0, %v1397
  %1399 = vmatmul.f32.gmra.mxu0 %v866
  %v1400 = vpop.f32.mrf.mxu0
  %v1401 = vadd.f32 0.0, %v1400
  %1402 = vmatmul.f32.gmra.mxu0 %v869
  %v1403 = vpop.f32.mrf.mxu0
  %v1404 = vadd.f32 0.0, %v1403
  %1405 = vmatmul.f32.gmra.mxu0 %v872
  %v1406 = vpop.f32.mrf.mxu0
  %v1407 = vadd.f32 0.0, %v1406
  %1408 = vmatmul.f32.gmra.mxu0 %v875
  %v1409 = vpop.f32.mrf.mxu0
  %v1410 = vadd.f32 0.0, %v1409
  %1411 = vmatmul.f32.gmra.mxu0 %v878
  %v1412 = vpop.f32.mrf.mxu0
  %v1413 = vadd.f32 0.0, %v1412
  %1414 = vmatmul.f32.gmra.mxu0 %v881
  %v1415 = vpop.f32.mrf.mxu0
  %v1416 = vadd.f32 0.0, %v1415
  %1417 = vmatmul.f32.gmra.mxu0 %v884
  %v1418 = vpop.f32.mrf.mxu0
  %v1419 = vadd.f32 0.0, %v1418
  %1420 = vmatmul.f32.gmra.mxu0 %v887
  %v1421 = vpop.f32.mrf.mxu0
  %v1422 = vadd.f32 0.0, %v1421
  %1423 = vmatmul.f32.gmra.mxu0 %v890
  %v1424 = vpop.f32.mrf.mxu0
  %v1425 = vadd.f32 0.0, %v1424
  %1426 = vmatmul.f32.gmra.mxu0 %v893
  %v1427 = vpop.f32.mrf.mxu0
  %v1428 = vadd.f32 0.0, %v1427
  %1429 = vmatmul.f32.gmra.mxu0 %v896
  %v1430 = vpop.f32.mrf.mxu0
  %v1431 = vadd.f32 0.0, %v1430
  %1432 = vmatmul.f32.gmra.mxu0 %v899
  %v1433 = vpop.f32.mrf.mxu0
  %v1434 = vadd.f32 0.0, %v1433
  %1435 = vmatmul.f32.gmra.mxu0 %v902
  %v1436 = vpop.f32.mrf.mxu0
  %v1437 = vadd.f32 0.0, %v1436
  %1438 = vmatmul.f32.gmra.mxu0 %v905
  %v1439 = vpop.f32.mrf.mxu0
  %v1440 = vadd.f32 0.0, %v1439
  %1441 = vmatmul.f32.gmra.mxu0 %v908
  %v1442 = vpop.f32.mrf.mxu0
  %v1443 = vadd.f32 0.0, %v1442
  %1444 = vmatmul.f32.gmra.mxu0 %v911
  %v1445 = vpop.f32.mrf.mxu0
  %v1446 = vadd.f32 0.0, %v1445
  %1447 = vmatmul.f32.gmra.mxu0 %v914
  %v1448 = vpop.f32.mrf.mxu0
  %v1449 = vadd.f32 0.0, %v1448
  %1450 = vmatmul.f32.gmra.mxu0 %v917
  %v1451 = vpop.f32.mrf.mxu0
  %v1452 = vadd.f32 0.0, %v1451
  %1453 = vmatmul.f32.gmra.mxu0 %v920
  %v1454 = vpop.f32.mrf.mxu0
  %v1455 = vadd.f32 0.0, %v1454
  %1456 = vmatmul.f32.gmra.mxu0 %v923
  %v1457 = vpop.f32.mrf.mxu0
  %v1458 = vadd.f32 0.0, %v1457
  %1459 = vdwg.mxu0
  %1460 = vmatpush.msra.mxu0 0.0
  %1461 = vmatpush.msra.mxu0 0.0
  %1462 = vmatpush.msra.mxu0 0.0
  %1463 = vmatpush.msra.mxu0 0.0
  %1464 = vmatpush.msra.mxu0 0.0
  %1465 = vmatpush.msra.mxu0 0.0
  %1466 = vmatpush.msra.mxu0 0.0
  %1467 = vmatpush.msra.mxu0 0.0
  %1468 = vmatpush.msra.mxu0 0.0
  %1469 = vmatpush.msra.mxu0 0.0
  %1470 = vmatpush.msra.mxu0 0.0
  %1471 = vmatpush.msra.mxu0 %v802
  %1472 = vmatpush.msra.mxu0 %v795
  %1473 = vmatpush.msra.mxu0 %v788
  %1474 = vmatpush.msra.mxu0 %v781
  %1475 = vmatpush.msra.mxu0 %v774
  %1476 = vmatmul.f32.gmra.mxu0 %v836
  %v1477 = vpop.f32.mrf.mxu0
  %v1478 = vadd.f32 0.0, %v1477
  %1479 = vmatmul.f32.gmra.mxu0 %v839
  %v1480 = vpop.f32.mrf.mxu0
  %v1481 = vadd.f32 0.0, %v1480
  %1482 = vmatmul.f32.gmra.mxu0 %v842
  %v1483 = vpop.f32.mrf.mxu0
  %v1484 = vadd.f32 0.0, %v1483
  %1485 = vmatmul.f32.gmra.mxu0 %v845
  %v1486 = vpop.f32.mrf.mxu0
  %v1487 = vadd.f32 0.0, %v1486
  %1488 = vmatmul.f32.gmra.mxu0 %v848
  %v1489 = vpop.f32.mrf.mxu0
  %v1490 = vadd.f32 0.0, %v1489
  %1491 = vmatmul.f32.gmra.mxu0 %v851
  %v1492 = vpop.f32.mrf.mxu0
  %v1493 = vadd.f32 0.0, %v1492
  %1494 = vmatmul.f32.gmra.mxu0 %v854
  %v1495 = vpop.f32.mrf.mxu0
  %v1496 = vadd.f32 0.0, %v1495
  %1497 = vmatmul.f32.gmra.mxu0 %v857
  %v1498 = vpop.f32.mrf.mxu0
  %v1499 = vadd.f32 0.0, %v1498
  %1500 = vmatmul.f32.gmra.mxu0 %v860
  %v1501 = vpop.f32.mrf.mxu0
  %v1502 = vadd.f32 0.0, %v1501
  %1503 = vmatmul.f32.gmra.mxu0 %v863
  %v1504 = vpop.f32.mrf.mxu0
  %v1505 = vadd.f32 0.0, %v1504
  %1506 = vmatmul.f32.gmra.mxu0 %v866
  %v1507 = vpop.f32.mrf.mxu0
  %v1508 = vadd.f32 0.0, %v1507
  %1509 = vmatmul.f32.gmra.mxu0 %v869
  %v1510 = vpop.f32.mrf.mxu0
  %v1511 = vadd.f32 0.0, %v1510
  %1512 = vmatmul.f32.gmra.mxu0 %v872
  %v1513 = vpop.f32.mrf.mxu0
  %v1514 = vadd.f32 0.0, %v1513
  %1515 = vmatmul.f32.gmra.mxu0 %v875
  %v1516 = vpop.f32.mrf.mxu0
  %v1517 = vadd.f32 0.0, %v1516
  %1518 = vmatmul.f32.gmra.mxu0 %v878
  %v1519 = vpop.f32.mrf.mxu0
  %v1520 = vadd.f32 0.0, %v1519
  %1521 = vmatmul.f32.gmra.mxu0 %v881
  %v1522 = vpop.f32.mrf.mxu0
  %v1523 = vadd.f32 0.0, %v1522
  %1524 = vmatmul.f32.gmra.mxu0 %v884
  %v1525 = vpop.f32.mrf.mxu0
  %v1526 = vadd.f32 0.0, %v1525
  %1527 = vmatmul.f32.gmra.mxu0 %v887
  %v1528 = vpop.f32.mrf.mxu0
  %v1529 = vadd.f32 0.0, %v1528
  %1530 = vmatmul.f32.gmra.mxu0 %v890
  %v1531 = vpop.f32.mrf.mxu0
  %v1532 = vadd.f32 0.0, %v1531
  %1533 = vmatmul.f32.gmra.mxu0 %v893
  %v1534 = vpop.f32.mrf.mxu0
  %v1535 = vadd.f32 0.0, %v1534
  %1536 = vmatmul.f32.gmra.mxu0 %v896
  %v1537 = vpop.f32.mrf.mxu0
  %v1538 = vadd.f32 0.0, %v1537
  %1539 = vmatmul.f32.gmra.mxu0 %v899
  %v1540 = vpop.f32.mrf.mxu0
  %v1541 = vadd.f32 0.0, %v1540
  %1542 = vmatmul.f32.gmra.mxu0 %v902
  %v1543 = vpop.f32.mrf.mxu0
  %v1544 = vadd.f32 0.0, %v1543
  %1545 = vmatmul.f32.gmra.mxu0 %v905
  %v1546 = vpop.f32.mrf.mxu0
  %v1547 = vadd.f32 0.0, %v1546
  %1548 = vmatmul.f32.gmra.mxu0 %v908
  %v1549 = vpop.f32.mrf.mxu0
  %v1550 = vadd.f32 0.0, %v1549
  %1551 = vmatmul.f32.gmra.mxu0 %v911
  %v1552 = vpop.f32.mrf.mxu0
  %v1553 = vadd.f32 0.0, %v1552
  %1554 = vmatmul.f32.gmra.mxu0 %v914
  %v1555 = vpop.f32.mrf.mxu0
  %v1556 = vadd.f32 0.0, %v1555
  %1557 = vmatmul.f32.gmra.mxu0 %v917
  %v1558 = vpop.f32.mrf.mxu0
  %v1559 = vadd.f32 0.0, %v1558
  %1560 = vmatmul.f32.gmra.mxu0 %v920
  %v1561 = vpop.f32.mrf.mxu0
  %v1562 = vadd.f32 0.0, %v1561
  %1563 = vmatmul.f32.gmra.mxu0 %v923
  %v1564 = vpop.f32.mrf.mxu0
  %v1565 = vadd.f32 0.0, %v1564
  %1566 = vdwg.mxu0
  %1567 = vmatpush.msra.mxu0 0.0
  %1568 = vmatpush.msra.mxu0 0.0
  %1569 = vmatpush.msra.mxu0 0.0
  %1570 = vmatpush.msra.mxu0 0.0
  %1571 = vmatpush.msra.mxu0 0.0
  %1572 = vmatpush.msra.mxu0 0.0
  %1573 = vmatpush.msra.mxu0 0.0
  %1574 = vmatpush.msra.mxu0 0.0
  %1575 = vmatpush.msra.mxu0 0.0
  %1576 = vmatpush.msra.mxu0 0.0
  %1577 = vmatpush.msra.mxu0 0.0
  %1578 = vmatpush.msra.mxu0 %v803
  %1579 = vmatpush.msra.mxu0 %v796
  %1580 = vmatpush.msra.mxu0 %v789
  %1581 = vmatpush.msra.mxu0 %v782
  %1582 = vmatpush.msra.mxu0 %v775
  %1583 = vmatmul.f32.gmra.mxu0 %v836
  %v1584 = vpop.f32.mrf.mxu0
  %v1585 = vadd.f32 0.0, %v1584
  %1586 = vmatmul.f32.gmra.mxu0 %v839
  %v1587 = vpop.f32.mrf.mxu0
  %v1588 = vadd.f32 0.0, %v1587
  %1589 = vmatmul.f32.gmra.mxu0 %v842
  %v1590 = vpop.f32.mrf.mxu0
  %v1591 = vadd.f32 0.0, %v1590
  %1592 = vmatmul.f32.gmra.mxu0 %v845
  %v1593 = vpop.f32.mrf.mxu0
  %v1594 = vadd.f32 0.0, %v1593
  %1595 = vmatmul.f32.gmra.mxu0 %v848
  %v1596 = vpop.f32.mrf.mxu0
  %v1597 = vadd.f32 0.0, %v1596
  %1598 = vmatmul.f32.gmra.mxu0 %v851
  %v1599 = vpop.f32.mrf.mxu0
  %v1600 = vadd.f32 0.0, %v1599
  %1601 = vmatmul.f32.gmra.mxu0 %v854
  %v1602 = vpop.f32.mrf.mxu0
  %v1603 = vadd.f32 0.0, %v1602
  %1604 = vmatmul.f32.gmra.mxu0 %v857
  %v1605 = vpop.f32.mrf.mxu0
  %v1606 = vadd.f32 0.0, %v1605
  %1607 = vmatmul.f32.gmra.mxu0 %v860
  %v1608 = vpop.f32.mrf.mxu0
  %v1609 = vadd.f32 0.0, %v1608
  %1610 = vmatmul.f32.gmra.mxu0 %v863
  %v1611 = vpop.f32.mrf.mxu0
  %v1612 = vadd.f32 0.0, %v1611
  %1613 = vmatmul.f32.gmra.mxu0 %v866
  %v1614 = vpop.f32.mrf.mxu0
  %v1615 = vadd.f32 0.0, %v1614
  %1616 = vmatmul.f32.gmra.mxu0 %v869
  %v1617 = vpop.f32.mrf.mxu0
  %v1618 = vadd.f32 0.0, %v1617
  %1619 = vmatmul.f32.gmra.mxu0 %v872
  %v1620 = vpop.f32.mrf.mxu0
  %v1621 = vadd.f32 0.0, %v1620
  %1622 = vmatmul.f32.gmra.mxu0 %v875
  %v1623 = vpop.f32.mrf.mxu0
  %v1624 = vadd.f32 0.0, %v1623
  %1625 = vmatmul.f32.gmra.mxu0 %v878
  %v1626 = vpop.f32.mrf.mxu0
  %v1627 = vadd.f32 0.0, %v1626
  %1628 = vmatmul.f32.gmra.mxu0 %v881
  %v1629 = vpop.f32.mrf.mxu0
  %v1630 = vadd.f32 0.0, %v1629
  %1631 = vmatmul.f32.gmra.mxu0 %v884
  %v1632 = vpop.f32.mrf.mxu0
  %v1633 = vadd.f32 0.0, %v1632
  %1634 = vmatmul.f32.gmra.mxu0 %v887
  %v1635 = vpop.f32.mrf.mxu0
  %v1636 = vadd.f32 0.0, %v1635
  %1637 = vmatmul.f32.gmra.mxu0 %v890
  %v1638 = vpop.f32.mrf.mxu0
  %v1639 = vadd.f32 0.0, %v1638
  %1640 = vmatmul.f32.gmra.mxu0 %v893
  %v1641 = vpop.f32.mrf.mxu0
  %v1642 = vadd.f32 0.0, %v1641
  %1643 = vmatmul.f32.gmra.mxu0 %v896
  %v1644 = vpop.f32.mrf.mxu0
  %v1645 = vadd.f32 0.0, %v1644
  %1646 = vmatmul.f32.gmra.mxu0 %v899
  %v1647 = vpop.f32.mrf.mxu0
  %v1648 = vadd.f32 0.0, %v1647
  %1649 = vmatmul.f32.gmra.mxu0 %v902
  %v1650 = vpop.f32.mrf.mxu0
  %v1651 = vadd.f32 0.0, %v1650
  %1652 = vmatmul.f32.gmra.mxu0 %v905
  %v1653 = vpop.f32.mrf.mxu0
  %v1654 = vadd.f32 0.0, %v1653
  %1655 = vmatmul.f32.gmra.mxu0 %v908
  %v1656 = vpop.f32.mrf.mxu0
  %v1657 = vadd.f32 0.0, %v1656
  %1658 = vmatmul.f32.gmra.mxu0 %v911
  %v1659 = vpop.f32.mrf.mxu0
  %v1660 = vadd.f32 0.0, %v1659
  %1661 = vmatmul.f32.gmra.mxu0 %v914
  %v1662 = vpop.f32.mrf.mxu0
  %v1663 = vadd.f32 0.0, %v1662
  %1664 = vmatmul.f32.gmra.mxu0 %v917
  %v1665 = vpop.f32.mrf.mxu0
  %v1666 = vadd.f32 0.0, %v1665
  %1667 = vmatmul.f32.gmra.mxu0 %v920
  %v1668 = vpop.f32.mrf.mxu0
  %v1669 = vadd.f32 0.0, %v1668
  %1670 = vmatmul.f32.gmra.mxu0 %v923
  %v1671 = vpop.f32.mrf.mxu0
  %v1672 = vadd.f32 0.0, %v1671
  %1673 = vdwg.mxu0
  %1674 = vst [vmem:[%s6] sm:$0xff] %v943
  %1675 = vst [vmem:[%s6 + $0x8] sm:$0xff] %v1050
  %1676 = vst [vmem:[%s6 + $0x10] sm:$0xff] %v1157
  %1677 = vst [vmem:[%s6 + $0x18] sm:$0xff] %v1264
  %1678 = vst [vmem:[%s6 + $0x20] sm:$0xff] %v1371
  %1679 = vst [vmem:[%s6 + $0x28] sm:$0xff] %v1478
  %1680 = vst.msk [vmem:[%s6 + $0x30] sm:$0xff] %vm378, %v1585
  %1681 = vst [vmem:[%s6 + $0x38] sm:$0xff] %v946
  %1682 = vst [vmem:[%s6 + $0x40] sm:$0xff] %v1053
  %1683 = vst [vmem:[%s6 + $0x48] sm:$0xff] %v1160
  %1684 = vst [vmem:[%s6 + $0x50] sm:$0xff] %v1267
  %1685 = vst [vmem:[%s6 + $0x58] sm:$0xff] %v1374
  %1686 = vst [vmem:[%s6 + $0x60] sm:$0xff] %v1481
  %1687 = vst.msk [vmem:[%s6 + $0x68] sm:$0xff] %vm378, %v1588
  %1688 = vst [vmem:[%s6 + $0x70] sm:$0xff] %v949
  %1689 = vst [vmem:[%s6 + $0x78] sm:$0xff] %v1056
  %1690 = vst [vmem:[%s6 + $0x80] sm:$0xff] %v1163
  %1691 = vst [vmem:[%s6 + $0x88] sm:$0xff] %v1270
  %1692 = vst [vmem:[%s6 + $0x90] sm:$0xff] %v1377
  %1693 = vst [vmem:[%s6 + $0x98] sm:$0xff] %v1484
  %1694 = vst.msk [vmem:[%s6 + $0xa0] sm:$0xff] %vm378, %v1591
  %1695 = vst [vmem:[%s6 + $0xa8] sm:$0xff] %v952
  %1696 = vst [vmem:[%s6 + $0xb0] sm:$0xff] %v1059
  %1697 = vst [vmem:[%s6 + $0xb8] sm:$0xff] %v1166
  %1698 = vst [vmem:[%s6 + $0xc0] sm:$0xff] %v1273
  %1699 = vst [vmem:[%s6 + $0xc8] sm:$0xff] %v1380
  %1700 = vst [vmem:[%s6 + $0xd0] sm:$0xff] %v1487
  %1701 = vst.msk [vmem:[%s6 + $0xd8] sm:$0xff] %vm378, %v1594
  %1702 = vst [vmem:[%s6 + $0xe0] sm:$0xff] %v955
  %1703 = vst [vmem:[%s6 + $0xe8] sm:$0xff] %v1062
  %1704 = vst [vmem:[%s6 + $0xf0] sm:$0xff] %v1169
  %1705 = vst [vmem:[%s6 + $0xf8] sm:$0xff] %v1276
  %1706 = vst [vmem:[%s6 + $0x100] sm:$0xff] %v1383
  %1707 = vst [vmem:[%s6 + $0x108] sm:$0xff] %v1490
  %1708 = vst.msk [vmem:[%s6 + $0x110] sm:$0xff] %vm378, %v1597
  %1709 = vst [vmem:[%s6 + $0x118] sm:$0xff] %v958
  %1710 = vst [vmem:[%s6 + $0x120] sm:$0xff] %v1065
  %1711 = vst [vmem:[%s6 + $0x128] sm:$0xff] %v1172
  %1712 = vst [vmem:[%s6 + $0x130] sm:$0xff] %v1279
  %1713 = vst [vmem:[%s6 + $0x138] sm:$0xff] %v1386
  %1714 = vst [vmem:[%s6 + $0x140] sm:$0xff] %v1493
  %1715 = vst.msk [vmem:[%s6 + $0x148] sm:$0xff] %vm378, %v1600
  %1716 = vst [vmem:[%s6 + $0x150] sm:$0xff] %v961
  %1717 = vst [vmem:[%s6 + $0x158] sm:$0xff] %v1068
  %1718 = vst [vmem:[%s6 + $0x160] sm:$0xff] %v1175
  %1719 = vst [vmem:[%s6 + $0x168] sm:$0xff] %v1282
  %1720 = vst [vmem:[%s6 + $0x170] sm:$0xff] %v1389
  %1721 = vst [vmem:[%s6 + $0x178] sm:$0xff] %v1496
  %1722 = vst.msk [vmem:[%s6 + $0x180] sm:$0xff] %vm378, %v1603
  %1723 = vst [vmem:[%s6 + $0x188] sm:$0xff] %v964
  %1724 = vst [vmem:[%s6 + $0x190] sm:$0xff] %v1071
  %1725 = vst [vmem:[%s6 + $0x198] sm:$0xff] %v1178
  %1726 = vst [vmem:[%s6 + $0x1a0] sm:$0xff] %v1285
  %1727 = vst [vmem:[%s6 + $0x1a8] sm:$0xff] %v1392
  %1728 = vst [vmem:[%s6 + $0x1b0] sm:$0xff] %v1499
  %1729 = vst.msk [vmem:[%s6 + $0x1b8] sm:$0xff] %vm378, %v1606
  %1730 = vst [vmem:[%s6 + $0x1c0] sm:$0xff] %v967
  %1731 = vst [vmem:[%s6 + $0x1c8] sm:$0xff] %v1074
  %1732 = vst [vmem:[%s6 + $0x1d0] sm:$0xff] %v1181
  %1733 = vst [vmem:[%s6 + $0x1d8] sm:$0xff] %v1288
  %1734 = vst [vmem:[%s6 + $0x1e0] sm:$0xff] %v1395
  %1735 = vst [vmem:[%s6 + $0x1e8] sm:$0xff] %v1502
  %1736 = vst.msk [vmem:[%s6 + $0x1f0] sm:$0xff] %vm378, %v1609
  %1737 = vst [vmem:[%s6 + $0x1f8] sm:$0xff] %v970
  %1738 = vst [vmem:[%s6 + $0x200] sm:$0xff] %v1077
  %1739 = vst [vmem:[%s6 + $0x208] sm:$0xff] %v1184
  %1740 = vst [vmem:[%s6 + $0x210] sm:$0xff] %v1291
  %1741 = vst [vmem:[%s6 + $0x218] sm:$0xff] %v1398
  %1742 = vst [vmem:[%s6 + $0x220] sm:$0xff] %v1505
  %1743 = vst.msk [vmem:[%s6 + $0x228] sm:$0xff] %vm378, %v1612
  %1744 = vst [vmem:[%s6 + $0x230] sm:$0xff] %v973
  %1745 = vst [vmem:[%s6 + $0x238] sm:$0xff] %v1080
  %1746 = vst [vmem:[%s6 + $0x240] sm:$0xff] %v1187
  %1747 = vst [vmem:[%s6 + $0x248] sm:$0xff] %v1294
  %1748 = vst [vmem:[%s6 + $0x250] sm:$0xff] %v1401
  %1749 = vst [vmem:[%s6 + $0x258] sm:$0xff] %v1508
  %1750 = vst.msk [vmem:[%s6 + $0x260] sm:$0xff] %vm378, %v1615
  %1751 = vst [vmem:[%s6 + $0x268] sm:$0xff] %v976
  %1752 = vst [vmem:[%s6 + $0x270] sm:$0xff] %v1083
  %1753 = vst [vmem:[%s6 + $0x278] sm:$0xff] %v1190
  %1754 = vst [vmem:[%s6 + $0x280] sm:$0xff] %v1297
  %1755 = vst [vmem:[%s6 + $0x288] sm:$0xff] %v1404
  %1756 = vst [vmem:[%s6 + $0x290] sm:$0xff] %v1511
  %1757 = vst.msk [vmem:[%s6 + $0x298] sm:$0xff] %vm378, %v1618
  %1758 = vst [vmem:[%s6 + $0x2a0] sm:$0xff] %v979
  %1759 = vst [vmem:[%s6 + $0x2a8] sm:$0xff] %v1086
  %1760 = vst [vmem:[%s6 + $0x2b0] sm:$0xff] %v1193
  %1761 = vst [vmem:[%s6 + $0x2b8] sm:$0xff] %v1300
  %1762 = vst [vmem:[%s6 + $0x2c0] sm:$0xff] %v1407
  %1763 = vst [vmem:[%s6 + $0x2c8] sm:$0xff] %v1514
  %1764 = vst.msk [vmem:[%s6 + $0x2d0] sm:$0xff] %vm378, %v1621
  %1765 = vst [vmem:[%s6 + $0x2d8] sm:$0xff] %v982
  %1766 = vst [vmem:[%s6 + $0x2e0] sm:$0xff] %v1089
  %1767 = vst [vmem:[%s6 + $0x2e8] sm:$0xff] %v1196
  %1768 = vst [vmem:[%s6 + $0x2f0] sm:$0xff] %v1303
  %1769 = vst [vmem:[%s6 + $0x2f8] sm:$0xff] %v1410
  %1770 = vst [vmem:[%s6 + $0x300] sm:$0xff] %v1517
  %1771 = vst.msk [vmem:[%s6 + $0x308] sm:$0xff] %vm378, %v1624
  %1772 = vst [vmem:[%s6 + $0x310] sm:$0xff] %v985
  %1773 = vst [vmem:[%s6 + $0x318] sm:$0xff] %v1092
  %1774 = vst [vmem:[%s6 + $0x320] sm:$0xff] %v1199
  %1775 = vst [vmem:[%s6 + $0x328] sm:$0xff] %v1306
  %1776 = vst [vmem:[%s6 + $0x330] sm:$0xff] %v1413
  %1777 = vst [vmem:[%s6 + $0x338] sm:$0xff] %v1520
  %1778 = vst.msk [vmem:[%s6 + $0x340] sm:$0xff] %vm378, %v1627
  %1779 = vst [vmem:[%s6 + $0x348] sm:$0xff] %v988
  %1780 = vst [vmem:[%s6 + $0x350] sm:$0xff] %v1095
  %1781 = vst [vmem:[%s6 + $0x358] sm:$0xff] %v1202
  %1782 = vst [vmem:[%s6 + $0x360] sm:$0xff] %v1309
  %1783 = vst [vmem:[%s6 + $0x368] sm:$0xff] %v1416
  %1784 = vst [vmem:[%s6 + $0x370] sm:$0xff] %v1523
  %1785 = vst.msk [vmem:[%s6 + $0x378] sm:$0xff] %vm378, %v1630
  %1786 = vst [vmem:[%s6 + $0x380] sm:$0xff] %v991
  %1787 = vst [vmem:[%s6 + $0x388] sm:$0xff] %v1098
  %1788 = vst [vmem:[%s6 + $0x390] sm:$0xff] %v1205
  %1789 = vst [vmem:[%s6 + $0x398] sm:$0xff] %v1312
  %1790 = vst [vmem:[%s6 + $0x3a0] sm:$0xff] %v1419
  %1791 = vst [vmem:[%s6 + $0x3a8] sm:$0xff] %v1526
  %1792 = vst.msk [vmem:[%s6 + $0x3b0] sm:$0xff] %vm378, %v1633
  %1793 = vst [vmem:[%s6 + $0x3b8] sm:$0xff] %v994
  %1794 = vst [vmem:[%s6 + $0x3c0] sm:$0xff] %v1101
  %1795 = vst [vmem:[%s6 + $0x3c8] sm:$0xff] %v1208
  %1796 = vst [vmem:[%s6 + $0x3d0] sm:$0xff] %v1315
  %1797 = vst [vmem:[%s6 + $0x3d8] sm:$0xff] %v1422
  %1798 = vst [vmem:[%s6 + $0x3e0] sm:$0xff] %v1529
  %1799 = vst.msk [vmem:[%s6 + $0x3e8] sm:$0xff] %vm378, %v1636
  %1800 = vst [vmem:[%s6 + $0x3f0] sm:$0xff] %v997
  %1801 = vst [vmem:[%s6 + $0x3f8] sm:$0xff] %v1104
  %1802 = vst [vmem:[%s6 + $0x400] sm:$0xff] %v1211
  %1803 = vst [vmem:[%s6 + $0x408] sm:$0xff] %v1318
  %1804 = vst [vmem:[%s6 + $0x410] sm:$0xff] %v1425
  %1805 = vst [vmem:[%s6 + $0x418] sm:$0xff] %v1532
  %1806 = vst.msk [vmem:[%s6 + $0x420] sm:$0xff] %vm378, %v1639
  %1807 = vst [vmem:[%s6 + $0x428] sm:$0xff] %v1000
  %1808 = vst [vmem:[%s6 + $0x430] sm:$0xff] %v1107
  %1809 = vst [vmem:[%s6 + $0x438] sm:$0xff] %v1214
  %1810 = vst [vmem:[%s6 + $0x440] sm:$0xff] %v1321
  %1811 = vst [vmem:[%s6 + $0x448] sm:$0xff] %v1428
  %1812 = vst [vmem:[%s6 + $0x450] sm:$0xff] %v1535
  %1813 = vst.msk [vmem:[%s6 + $0x458] sm:$0xff] %vm378, %v1642
  %1814 = vst [vmem:[%s6 + $0x460] sm:$0xff] %v1003
  %1815 = vst [vmem:[%s6 + $0x468] sm:$0xff] %v1110
  %1816 = vst [vmem:[%s6 + $0x470] sm:$0xff] %v1217
  %1817 = vst [vmem:[%s6 + $0x478] sm:$0xff] %v1324
  %1818 = vst [vmem:[%s6 + $0x480] sm:$0xff] %v1431
  %1819 = vst [vmem:[%s6 + $0x488] sm:$0xff] %v1538
  %1820 = vst.msk [vmem:[%s6 + $0x490] sm:$0xff] %vm378, %v1645
  %1821 = vst [vmem:[%s6 + $0x498] sm:$0xff] %v1006
  %1822 = vst [vmem:[%s6 + $0x4a0] sm:$0xff] %v1113
  %1823 = vst [vmem:[%s6 + $0x4a8] sm:$0xff] %v1220
  %1824 = vst [vmem:[%s6 + $0x4b0] sm:$0xff] %v1327
  %1825 = vst [vmem:[%s6 + $0x4b8] sm:$0xff] %v1434
  %1826 = vst [vmem:[%s6 + $0x4c0] sm:$0xff] %v1541
  %1827 = vst.msk [vmem:[%s6 + $0x4c8] sm:$0xff] %vm378, %v1648
  %1828 = vst [vmem:[%s6 + $0x4d0] sm:$0xff] %v1009
  %1829 = vst [vmem:[%s6 + $0x4d8] sm:$0xff] %v1116
  %1830 = vst [vmem:[%s6 + $0x4e0] sm:$0xff] %v1223
  %1831 = vst [vmem:[%s6 + $0x4e8] sm:$0xff] %v1330
  %1832 = vst [vmem:[%s6 + $0x4f0] sm:$0xff] %v1437
  %1833 = vst [vmem:[%s6 + $0x4f8] sm:$0xff] %v1544
  %1834 = vst.msk [vmem:[%s6 + $0x500] sm:$0xff] %vm378, %v1651
  %1835 = vst [vmem:[%s6 + $0x508] sm:$0xff] %v1012
  %1836 = vst [vmem:[%s6 + $0x510] sm:$0xff] %v1119
  %1837 = vst [vmem:[%s6 + $0x518] sm:$0xff] %v1226
  %1838 = vst [vmem:[%s6 + $0x520] sm:$0xff] %v1333
  %1839 = vst [vmem:[%s6 + $0x528] sm:$0xff] %v1440
  %1840 = vst [vmem:[%s6 + $0x530] sm:$0xff] %v1547
  %1841 = vst.msk [vmem:[%s6 + $0x538] sm:$0xff] %vm378, %v1654
  %1842 = vst [vmem:[%s6 + $0x540] sm:$0xff] %v1015
  %1843 = vst [vmem:[%s6 + $0x548] sm:$0xff] %v1122
  %1844 = vst [vmem:[%s6 + $0x550] sm:$0xff] %v1229
  %1845 = vst [vmem:[%s6 + $0x558] sm:$0xff] %v1336
  %1846 = vst [vmem:[%s6 + $0x560] sm:$0xff] %v1443
  %1847 = vst [vmem:[%s6 + $0x568] sm:$0xff] %v1550
  %1848 = vst.msk [vmem:[%s6 + $0x570] sm:$0xff] %vm378, %v1657
  %1849 = vst [vmem:[%s6 + $0x578] sm:$0xff] %v1018
  %1850 = vst [vmem:[%s6 + $0x580] sm:$0xff] %v1125
  %1851 = vst [vmem:[%s6 + $0x588] sm:$0xff] %v1232
  %1852 = vst [vmem:[%s6 + $0x590] sm:$0xff] %v1339
  %1853 = vst [vmem:[%s6 + $0x598] sm:$0xff] %v1446
  %1854 = vst [vmem:[%s6 + $0x5a0] sm:$0xff] %v1553
  %1855 = vst.msk [vmem:[%s6 + $0x5a8] sm:$0xff] %vm378, %v1660
  %1856 = vst [vmem:[%s6 + $0x5b0] sm:$0xff] %v1021
  %1857 = vst [vmem:[%s6 + $0x5b8] sm:$0xff] %v1128
  %1858 = vst [vmem:[%s6 + $0x5c0] sm:$0xff] %v1235
  %1859 = vst [vmem:[%s6 + $0x5c8] sm:$0xff] %v1342
  %1860 = vst [vmem:[%s6 + $0x5d0] sm:$0xff] %v1449
  %1861 = vst [vmem:[%s6 + $0x5d8] sm:$0xff] %v1556
  %1862 = vst.msk [vmem:[%s6 + $0x5e0] sm:$0xff] %vm378, %v1663
  %1863 = vst [vmem:[%s6 + $0x5e8] sm:$0xff] %v1024
  %1864 = vst [vmem:[%s6 + $0x5f0] sm:$0xff] %v1131
  %1865 = vst [vmem:[%s6 + $0x5f8] sm:$0xff] %v1238
  %1866 = vst [vmem:[%s6 + $0x600] sm:$0xff] %v1345
  %1867 = vst [vmem:[%s6 + $0x608] sm:$0xff] %v1452
  %1868 = vst [vmem:[%s6 + $0x610] sm:$0xff] %v1559
  %1869 = vst.msk [vmem:[%s6 + $0x618] sm:$0xff] %vm378, %v1666
  %1870 = vst [vmem:[%s6 + $0x620] sm:$0xff] %v1027
  %1871 = vst [vmem:[%s6 + $0x628] sm:$0xff] %v1134
  %1872 = vst [vmem:[%s6 + $0x630] sm:$0xff] %v1241
  %1873 = vst [vmem:[%s6 + $0x638] sm:$0xff] %v1348
  %1874 = vst [vmem:[%s6 + $0x640] sm:$0xff] %v1455
  %1875 = vst [vmem:[%s6 + $0x648] sm:$0xff] %v1562
  %1876 = vst.msk [vmem:[%s6 + $0x650] sm:$0xff] %vm378, %v1669
  %1877 = vst [vmem:[%s6 + $0x658] sm:$0xff] %v1030
  %1878 = vst [vmem:[%s6 + $0x660] sm:$0xff] %v1137
  %1879 = vst [vmem:[%s6 + $0x668] sm:$0xff] %v1244
  %1880 = vst [vmem:[%s6 + $0x670] sm:$0xff] %v1351
  %1881 = vst [vmem:[%s6 + $0x678] sm:$0xff] %v1458
  %1882 = vst [vmem:[%s6 + $0x680] sm:$0xff] %v1565
  %1883 = vst.msk [vmem:[%s6 + $0x688] sm:$0xff] %vm378, %v1672
  // Predicated region
  $region26: #{tpu_custom_call.1} parent=0 // pred_check
    _
  $region27: #{tpu_custom_call.1} parent=0 // pred_check_branch
    %1885 = sbr.rel (0) target = $region29
  $region28: #{tpu_custom_call.1} parent=0 // pred_region
    _
  $region29: #{tpu_custom_call.1} parent=0 // pred_fallthru
    _
  // Predicated region
  $region30: #{tpu_custom_call.1} parent=0 // pred_check
    _
  $region31: #{tpu_custom_call.1} parent=0 // pred_check_branch
    %1887 = sbr.rel (0) target = $region33
  $region32: #{tpu_custom_call.1} parent=0 // pred_region
    _
  $region33: #{tpu_custom_call.1} parent=0 // pred_fallthru
    _

</llo_original>
